<compile_context>
chip_gen: v6e
topology: v6e:2x2x1
jax: 0.10.0
libtpu: 0.0.40
codegen_flags: <defaults>
</compile_context>

<pallas_src>
import numpy as np
import jax
import jax.numpy as jnp
from jax.experimental import pallas as pl
from jax.experimental.pallas import tpu as pltpu


# ---------------------------------------------------------------------------
# Static architecture config (representative parsed_layers instantiation).
# ---------------------------------------------------------------------------
B = 2                 # batch
CIN = 4               # input channels
H = W = 16            # input spatial size
KSIZE = 3             # conv kernel size
PAD = 1               # conv padding
COUT = 8              # conv out channels (out_channels_coefficient = 2)
POOL = 2              # maxpool kernel == stride
NUM_CLASSES = 2

HO, WO = H, W                          # conv output spatial (stride 1, pad 1)
HP, WP = H + 2 * PAD, W + 2 * PAD      # padded input spatial (18, 18)
HPOOL, WPOOL = HO // POOL, WO // POOL  # pooled spatial (8, 8)
FEAT = COUT * HPOOL * WPOOL            # 512 : classification-head input size

KDIM = WP * CIN                        # 72  : contraction dim of a tap matmul
HALF_LANES = COUT * WPOOL              # 64  : lanes per output-column parity
CONV_LANES = POOL * HALF_LANES         # 128 : conv output lane width (= WO*COUT)


# ---------------------------------------------------------------------------
# Fused Pallas kernel: ConvAct + MaxPool + ClassificationHead
# ---------------------------------------------------------------------------
def _fused_forward_kernel(xp_ref, wtap_ref, bias_ref, hw_ref, hb_ref, o_ref):
    """Whole forward pass in one kernel.

    xp_ref   : (B*HP, WP*CIN) f32   padded NHWC input; row = b*HP + r,
                                    lane = c*CIN + ci
    wtap_ref : (KSIZE, KDIM, CONV_LANES) banded conv tap weights
    bias_ref : (1, CONV_LANES)      conv bias, broadcast over rows
    hw_ref   : (HPOOL, HALF_LANES, NUM_CLASSES) permuted head weight
    hb_ref   : (1, NUM_CLASSES)     head bias
    o_ref    : (B, NUM_CLASSES)     logits
    """
    # ---- ConvAct: 3 row-shifted MXU matmuls (kw & Cin folded into K=72). --
    # acc[b*HO + i, dj*64 + co*8 + pj] = conv[b, co, i, 2*pj + dj]  (pre-bias)
    acc = jnp.zeros((B * HO, CONV_LANES), jnp.float32)
    for kh in range(KSIZE):
        xs = jnp.concatenate(
            [xp_ref[b * HP + kh:b * HP + kh + HO, :] for b in range(B)],
            axis=0)                                               # (32, 72)
        acc = acc + jnp.dot(xs, wtap_ref[kh],
                            preferred_element_type=jnp.float32)
    acc = jnp.maximum(acc + bias_ref[...], 0.0)                   # bias + ReLU

    # ---- MaxPool, column direction (dj): aligned 64-lane halves. ----------
    lp = jnp.maximum(acc[:, :HALF_LANES], acc[:, HALF_LANES:])    # (32, 64)
    # lp[b*HO + i, co*8 + pj] = max_dj relu(conv)[b, co, i, 2*pj + dj]

    # ---- MaxPool (row direction, di) fused with the classification head. --
    # logits[b, cls] = sum_pi pooled_row(b, pi) @ hw[pi]
    logits = jnp.zeros((B, NUM_CLASSES), jnp.float32)
    for pi in range(HPOOL):
        r = POOL * pi
        top = jnp.concatenate(
            [lp[b * HO + r:b * HO + r + 1, :] for b in range(B)], axis=0)
        bot = jnp.concatenate(
            [lp[b * HO + r + 1:b * HO + r + 2, :] for b in range(B)], axis=0)
        rows = jnp.maximum(top, bot)                              # (B, 64)
        logits = logits + jnp.dot(rows, hw_ref[pi],
                                  preferred_element_type=jnp.float32)
    o_ref[...] = (logits + hb_ref[...]).astype(o_ref.dtype)


def _fused_forward(xp, w_taps, bias_row, head_w3, head_b_row):
    cost = pl.CostEstimate(
        flops=2 * (B * HO) * KDIM * CONV_LANES * KSIZE
        + 2 * B * HALF_LANES * NUM_CLASSES * HPOOL,
        transcendentals=0,
        bytes_accessed=4 * (xp.size + w_taps.size + bias_row.size
                            + head_w3.size + head_b_row.size
                            + B * NUM_CLASSES),
    )
    return pl.pallas_call(
        _fused_forward_kernel,
        out_shape=jax.ShapeDtypeStruct((B, NUM_CLASSES), jnp.float32),
        grid=(1,),
        in_specs=[
            pl.BlockSpec((B * HP, KDIM), lambda i: (0, 0)),
            pl.BlockSpec((KSIZE, KDIM, CONV_LANES), lambda i: (0, 0, 0)),
            pl.BlockSpec((1, CONV_LANES), lambda i: (0, 0)),
            pl.BlockSpec((HPOOL, HALF_LANES, NUM_CLASSES), lambda i: (0, 0, 0)),
            pl.BlockSpec((1, NUM_CLASSES), lambda i: (0, 0)),
        ],
        out_specs=pl.BlockSpec((B, NUM_CLASSES), lambda i: (0, 0)),
        compiler_params=pltpu.CompilerParams(
            dimension_semantics=("arbitrary",)),
        cost_estimate=cost,
    )(xp, w_taps, bias_row, head_w3, head_b_row)


# ---------------------------------------------------------------------------
# Full network forward (one tiny layout prep, then the single fused kernel)
# ---------------------------------------------------------------------------
@jax.jit
def generic_network_forward(x, kparams):
    """x is NCHW like the PyTorch module.  The only XLA-side work is one
    transpose/pad/reshape of the ~4 KB input feeding the fused kernel."""
    xp = jnp.transpose(x, (0, 2, 3, 1))                           # NCHW -> NHWC
    xp = jnp.pad(xp, ((0, 0), (PAD, PAD), (PAD, PAD), (0, 0)))
    xp = xp.reshape(B * HP, WP * CIN)
    return _fused_forward(xp, kparams["w_taps"], kparams["bias_row"],
                          kparams["head_w3"], kparams["head_b_row"])


# ---------------------------------------------------------------------------
# Parameters: raw (PyTorch layout) + one-time repack into kernel layouts
# ---------------------------------------------------------------------------
def init_params(key):
    """Raw parameters in the PyTorch layouts (Conv2d / Linear)."""
    k1, k2, k3, k4 = jax.random.split(key, 4)
    return {
        "conv_w": 0.1 * jax.random.normal(
            k1, (COUT, CIN, KSIZE, KSIZE), dtype=jnp.float32),
        "conv_b": 0.1 * jax.random.normal(k2, (COUT,), dtype=jnp.float32),
        "head_w": 0.1 * jax.random.normal(
            k3, (NUM_CLASSES, FEAT), dtype=jnp.float32),
        "head_b": 0.1 * jax.random.normal(
            k4, (NUM_CLASSES,), dtype=jnp.float32),
    }


def prepare_params(raw):
    """One-time (init) repack of the PyTorch-layout weights into the fused
    kernel's layouts.  Zero per-forward cost."""
    conv_w = np.asarray(raw["conv_w"])          # (COUT, CIN, 3, 3)
    conv_b = np.asarray(raw["conv_b"])          # (COUT,)
    head_w = np.asarray(raw["head_w"])          # (NUM_CLASSES, FEAT) NCHW-flat
    head_b = np.asarray(raw["head_b"])          # (NUM_CLASSES,)

    # Banded tap weights: for tap row kh,
    #   acc[row, dj*64 + co*8 + pj] += sum_{jj,ci} xpad[b, i+kh, jj, ci]
    #                                  * w_taps[kh, jj*CIN + ci, lane]
    # with output column j = 2*pj + dj and jj = j + kw.  This realizes the
    # kw taps + channel contraction of the 3x3 conv as a single MXU matmul
    # per kh, with a lane-dense 128-wide (= WO*COUT) result.
    w_taps = np.zeros((KSIZE, KDIM, CONV_LANES), np.float32)
    for kh in range(KSIZE):
        for kw in range(KSIZE):
            block = conv_w[:, :, kh, kw].T                    # (CIN, COUT)
            for j in range(WO):
                pj, dj = j // POOL, j % POOL
                jj = j + kw                                   # padded input col
                lane0 = dj * HALF_LANES + pj
                w_taps[kh, jj * CIN:(jj + 1) * CIN,
                       lane0:lane0 + HALF_LANES:WPOOL] = block

    # Conv bias broadcast over the (dj, co, pj) lane layout.
    bias_row = np.tile(np.repeat(conv_b, WPOOL), POOL).reshape(1, CONV_LANES)

    # Head weight: bake the PyTorch NCHW flatten order (co, pi, pj) and the
    # Linear transpose into the weight so the kernel consumes the pooled
    # activations in their native (pi, co*8 + pj) layout.
    hw = head_w.reshape(NUM_CLASSES, COUT, HPOOL, WPOOL)      # (cls, co, pi, pj)
    hw = np.transpose(hw, (2, 1, 3, 0))                       # (pi, co, pj, cls)
    head_w3 = np.ascontiguousarray(
        hw.reshape(HPOOL, COUT * WPOOL, NUM_CLASSES))         # (8, 64, 2)
    head_b_row = head_b.reshape(1, NUM_CLASSES)

    return {
        "w_taps": jnp.asarray(w_taps),
        "bias_row": jnp.asarray(bias_row.astype(np.float32)),
        "head_w3": jnp.asarray(head_w3.astype(np.float32)),
        "head_b_row": jnp.asarray(head_b_row.astype(np.float32)),
    }


# ---------------------------------------------------------------------------
# Plain-JAX reference (exactly the PyTorch semantics) for a numerics check
# ---------------------------------------------------------------------------
def reference_forward(x, raw):
    out = jax.lax.conv_general_dilated(
        x, raw["conv_w"], window_strides=(1, 1),
        padding=((PAD, PAD), (PAD, PAD)),
        dimension_numbers=("NCHW", "OIHW", "NCHW"))
    out = out + raw["conv_b"].reshape(1, COUT, 1, 1)
    out = jnp.maximum(out, 0.0)
    out = jax.lax.reduce_window(
        out, -jnp.inf, jax.lax.max,
        window_dimensions=(1, 1, POOL, POOL),
        window_strides=(1, 1, POOL, POOL),
        padding="VALID")
    feats = out.reshape(out.shape[0], -1)                     # NCHW flatten
    return feats @ raw["head_w"].T + raw["head_b"]


if __name__ == "__main__":
    key = jax.random.PRNGKey(0)
    k_in, k_par = jax.random.split(key)

    x = jax.random.normal(k_in, (B, CIN, H, W), dtype=jnp.float32)
    raw = init_params(k_par)
    kparams = prepare_params(raw)

    out = generic_network_forward(x, kparams)
    out = jax.block_until_ready(out)

    assert out.shape == (B, NUM_CLASSES), out.shape
    assert out.dtype == jnp.float32

    ref = jax.block_until_ready(reference_forward(x, raw))
    err = float(jnp.max(jnp.abs(out - ref)))
    assert err < 5e-2, f"kernel/reference mismatch, max abs err = {err}"

    print("KERNEL_OK")
</pallas_src>

<mosaic_0001>
module attributes {stable_mosaic.version = 11 : i64} {
  func.func @_fused_forward_kernel(%arg0: i32, %arg1: memref<36x72xf32, #tpu.memory_space<vmem>>, %arg2: memref<3x72x128xf32, #tpu.memory_space<vmem>>, %arg3: memref<1x128xf32, #tpu.memory_space<vmem>>, %arg4: memref<8x64x2xf32, #tpu.memory_space<vmem>>, %arg5: memref<1x2xf32, #tpu.memory_space<vmem>>, %arg6: memref<2x2xf32, #tpu.memory_space<vmem>>) attributes {dimension_semantics = [#tpu.dimension_semantics<arbitrary>], iteration_bounds = array<i64: 1>, scalar_prefetch = 0 : i64, scratch_operands = 0 : i64, tpu.core_type = #tpu.core_type<tc>, window_params = [{pipeline_mode = #tpu.pipeline_mode<synchronous>, transform_indices = @transform_0, window_bounds = array<i64: 36, 72>}, {pipeline_mode = #tpu.pipeline_mode<synchronous>, transform_indices = @transform_1, window_bounds = array<i64: 3, 72, 128>}, {pipeline_mode = #tpu.pipeline_mode<synchronous>, transform_indices = @transform_2, window_bounds = array<i64: 1, 128>}, {pipeline_mode = #tpu.pipeline_mode<synchronous>, transform_indices = @transform_3, window_bounds = array<i64: 8, 64, 2>}, {pipeline_mode = #tpu.pipeline_mode<synchronous>, transform_indices = @transform_4, window_bounds = array<i64: 1, 2>}, {pipeline_mode = #tpu.pipeline_mode<synchronous>, transform_indices = @transform_5, window_bounds = array<i64: 2, 2>}]} {
    %cst = arith.constant 0.000000e+00 : f32
    %0 = vector.broadcast %cst : f32 to vector<32x128xf32>
    %c0 = arith.constant 0 : index
    %c0_0 = arith.constant 0 : index
    %1 = vector.load %arg1[%c0, %c0_0] : memref<36x72xf32, #tpu.memory_space<vmem>>, vector<16x72xf32>
    %c18 = arith.constant 18 : index
    %c0_1 = arith.constant 0 : index
    %2 = vector.load %arg1[%c18, %c0_1] : memref<36x72xf32, #tpu.memory_space<vmem>>, vector<16x72xf32>
    %3 = tpu.concatenate %1, %2 in 0 : vector<16x72xf32>, vector<16x72xf32> -> vector<32x72xf32>
    %c0_2 = arith.constant 0 : index
    %c0_3 = arith.constant 0 : index
    %c0_4 = arith.constant 0 : index
    %4 = vector.load %arg2[%c0_2, %c0_3, %c0_4] : memref<3x72x128xf32, #tpu.memory_space<vmem>>, vector<1x72x128xf32>
    %5 = vector.shape_cast %4 : vector<1x72x128xf32> to vector<72x128xf32>
    %cst_5 = arith.constant dense<0.000000e+00> : vector<32x128xf32>
    %6 = tpu.matmul %3, %5, %cst_5 {dimension_numbers = #tpu.dot_dimension_numbers<[1], [0], [0], [1], [0, 0, 1, 1], [], []>} : vector<32x72xf32>, vector<72x128xf32>, vector<32x128xf32> -> vector<32x128xf32>
    %7 = arith.addf %0, %6 : vector<32x128xf32>
    %c1 = arith.constant 1 : index
    %c0_6 = arith.constant 0 : index
    %8 = vector.load %arg1[%c1, %c0_6] : memref<36x72xf32, #tpu.memory_space<vmem>>, vector<16x72xf32>
    %c19 = arith.constant 19 : index
    %c0_7 = arith.constant 0 : index
    %9 = vector.load %arg1[%c19, %c0_7] : memref<36x72xf32, #tpu.memory_space<vmem>>, vector<16x72xf32>
    %10 = tpu.concatenate %8, %9 in 0 : vector<16x72xf32>, vector<16x72xf32> -> vector<32x72xf32>
    %c1_8 = arith.constant 1 : index
    %c0_9 = arith.constant 0 : index
    %c0_10 = arith.constant 0 : index
    %11 = vector.load %arg2[%c1_8, %c0_9, %c0_10] : memref<3x72x128xf32, #tpu.memory_space<vmem>>, vector<1x72x128xf32>
    %12 = vector.shape_cast %11 : vector<1x72x128xf32> to vector<72x128xf32>
    %cst_11 = arith.constant dense<0.000000e+00> : vector<32x128xf32>
    %13 = tpu.matmul %10, %12, %cst_11 {dimension_numbers = #tpu.dot_dimension_numbers<[1], [0], [0], [1], [0, 0, 1, 1], [], []>} : vector<32x72xf32>, vector<72x128xf32>, vector<32x128xf32> -> vector<32x128xf32>
    %14 = arith.addf %7, %13 : vector<32x128xf32>
    %c2 = arith.constant 2 : index
    %c0_12 = arith.constant 0 : index
    %15 = vector.load %arg1[%c2, %c0_12] : memref<36x72xf32, #tpu.memory_space<vmem>>, vector<16x72xf32>
    %c20 = arith.constant 20 : index
    %c0_13 = arith.constant 0 : index
    %16 = vector.load %arg1[%c20, %c0_13] : memref<36x72xf32, #tpu.memory_space<vmem>>, vector<16x72xf32>
    %17 = tpu.concatenate %15, %16 in 0 : vector<16x72xf32>, vector<16x72xf32> -> vector<32x72xf32>
    %c2_14 = arith.constant 2 : index
    %c0_15 = arith.constant 0 : index
    %c0_16 = arith.constant 0 : index
    %18 = vector.load %arg2[%c2_14, %c0_15, %c0_16] : memref<3x72x128xf32, #tpu.memory_space<vmem>>, vector<1x72x128xf32>
    %19 = vector.shape_cast %18 : vector<1x72x128xf32> to vector<72x128xf32>
    %cst_17 = arith.constant dense<0.000000e+00> : vector<32x128xf32>
    %20 = tpu.matmul %17, %19, %cst_17 {dimension_numbers = #tpu.dot_dimension_numbers<[1], [0], [0], [1], [0, 0, 1, 1], [], []>} : vector<32x72xf32>, vector<72x128xf32>, vector<32x128xf32> -> vector<32x128xf32>
    %21 = arith.addf %14, %20 : vector<32x128xf32>
    %c0_18 = arith.constant 0 : index
    %c0_19 = arith.constant 0 : index
    %22 = vector.load %arg3[%c0_18, %c0_19] : memref<1x128xf32, #tpu.memory_space<vmem>>, vector<1x128xf32>
    %23 = vector.broadcast %22 : vector<1x128xf32> to vector<32x128xf32>
    %24 = arith.addf %21, %23 : vector<32x128xf32>
    %cst_20 = arith.constant 0.000000e+00 : f32
    %25 = vector.broadcast %cst_20 : f32 to vector<32x128xf32>
    %26 = arith.maximumf %24, %25 : vector<32x128xf32>
    %27 = vector.extract_strided_slice %26 {offsets = [0, 0], sizes = [32, 64], strides = [1, 1]} : vector<32x128xf32> to vector<32x64xf32>
    %28 = vector.extract_strided_slice %26 {offsets = [0, 64], sizes = [32, 64], strides = [1, 1]} : vector<32x128xf32> to vector<32x64xf32>
    %29 = arith.maximumf %27, %28 : vector<32x64xf32>
    %cst_21 = arith.constant 0.000000e+00 : f32
    %30 = vector.broadcast %cst_21 : f32 to vector<2x2xf32>
    %31 = vector.extract_strided_slice %29 {offsets = [0, 0], sizes = [1, 64], strides = [1, 1]} : vector<32x64xf32> to vector<1x64xf32>
    %32 = vector.extract_strided_slice %29 {offsets = [16, 0], sizes = [1, 64], strides = [1, 1]} : vector<32x64xf32> to vector<1x64xf32>
    %33 = tpu.concatenate %31, %32 in 0 : vector<1x64xf32>, vector<1x64xf32> -> vector<2x64xf32>
    %34 = vector.extract_strided_slice %29 {offsets = [1, 0], sizes = [1, 64], strides = [1, 1]} : vector<32x64xf32> to vector<1x64xf32>
    %35 = vector.extract_strided_slice %29 {offsets = [17, 0], sizes = [1, 64], strides = [1, 1]} : vector<32x64xf32> to vector<1x64xf32>
    %36 = tpu.concatenate %34, %35 in 0 : vector<1x64xf32>, vector<1x64xf32> -> vector<2x64xf32>
    %37 = arith.maximumf %33, %36 : vector<2x64xf32>
    %c0_22 = arith.constant 0 : index
    %c0_23 = arith.constant 0 : index
    %c0_24 = arith.constant 0 : index
    %38 = vector.load %arg4[%c0_22, %c0_23, %c0_24] : memref<8x64x2xf32, #tpu.memory_space<vmem>>, vector<1x64x2xf32>
    %39 = vector.shape_cast %38 : vector<1x64x2xf32> to vector<64x2xf32>
    %cst_25 = arith.constant dense<0.000000e+00> : vector<2x2xf32>
    %40 = tpu.matmul %37, %39, %cst_25 {dimension_numbers = #tpu.dot_dimension_numbers<[1], [0], [0], [1], [0, 0, 1, 1], [], []>} : vector<2x64xf32>, vector<64x2xf32>, vector<2x2xf32> -> vector<2x2xf32>
    %41 = arith.addf %30, %40 : vector<2x2xf32>
    %42 = vector.extract_strided_slice %29 {offsets = [2, 0], sizes = [1, 64], strides = [1, 1]} : vector<32x64xf32> to vector<1x64xf32>
    %43 = vector.extract_strided_slice %29 {offsets = [18, 0], sizes = [1, 64], strides = [1, 1]} : vector<32x64xf32> to vector<1x64xf32>
    %44 = tpu.concatenate %42, %43 in 0 : vector<1x64xf32>, vector<1x64xf32> -> vector<2x64xf32>
    %45 = vector.extract_strided_slice %29 {offsets = [3, 0], sizes = [1, 64], strides = [1, 1]} : vector<32x64xf32> to vector<1x64xf32>
    %46 = vector.extract_strided_slice %29 {offsets = [19, 0], sizes = [1, 64], strides = [1, 1]} : vector<32x64xf32> to vector<1x64xf32>
    %47 = tpu.concatenate %45, %46 in 0 : vector<1x64xf32>, vector<1x64xf32> -> vector<2x64xf32>
    %48 = arith.maximumf %44, %47 : vector<2x64xf32>
    %c1_26 = arith.constant 1 : index
    %c0_27 = arith.constant 0 : index
    %c0_28 = arith.constant 0 : index
    %49 = vector.load %arg4[%c1_26, %c0_27, %c0_28] : memref<8x64x2xf32, #tpu.memory_space<vmem>>, vector<1x64x2xf32>
    %50 = vector.shape_cast %49 : vector<1x64x2xf32> to vector<64x2xf32>
    %cst_29 = arith.constant dense<0.000000e+00> : vector<2x2xf32>
    %51 = tpu.matmul %48, %50, %cst_29 {dimension_numbers = #tpu.dot_dimension_numbers<[1], [0], [0], [1], [0, 0, 1, 1], [], []>} : vector<2x64xf32>, vector<64x2xf32>, vector<2x2xf32> -> vector<2x2xf32>
    %52 = arith.addf %41, %51 : vector<2x2xf32>
    %53 = vector.extract_strided_slice %29 {offsets = [4, 0], sizes = [1, 64], strides = [1, 1]} : vector<32x64xf32> to vector<1x64xf32>
    %54 = vector.extract_strided_slice %29 {offsets = [20, 0], sizes = [1, 64], strides = [1, 1]} : vector<32x64xf32> to vector<1x64xf32>
    %55 = tpu.concatenate %53, %54 in 0 : vector<1x64xf32>, vector<1x64xf32> -> vector<2x64xf32>
    %56 = vector.extract_strided_slice %29 {offsets = [5, 0], sizes = [1, 64], strides = [1, 1]} : vector<32x64xf32> to vector<1x64xf32>
    %57 = vector.extract_strided_slice %29 {offsets = [21, 0], sizes = [1, 64], strides = [1, 1]} : vector<32x64xf32> to vector<1x64xf32>
    %58 = tpu.concatenate %56, %57 in 0 : vector<1x64xf32>, vector<1x64xf32> -> vector<2x64xf32>
    %59 = arith.maximumf %55, %58 : vector<2x64xf32>
    %c2_30 = arith.constant 2 : index
    %c0_31 = arith.constant 0 : index
    %c0_32 = arith.constant 0 : index
    %60 = vector.load %arg4[%c2_30, %c0_31, %c0_32] : memref<8x64x2xf32, #tpu.memory_space<vmem>>, vector<1x64x2xf32>
    %61 = vector.shape_cast %60 : vector<1x64x2xf32> to vector<64x2xf32>
    %cst_33 = arith.constant dense<0.000000e+00> : vector<2x2xf32>
    %62 = tpu.matmul %59, %61, %cst_33 {dimension_numbers = #tpu.dot_dimension_numbers<[1], [0], [0], [1], [0, 0, 1, 1], [], []>} : vector<2x64xf32>, vector<64x2xf32>, vector<2x2xf32> -> vector<2x2xf32>
    %63 = arith.addf %52, %62 : vector<2x2xf32>
    %64 = vector.extract_strided_slice %29 {offsets = [6, 0], sizes = [1, 64], strides = [1, 1]} : vector<32x64xf32> to vector<1x64xf32>
    %65 = vector.extract_strided_slice %29 {offsets = [22, 0], sizes = [1, 64], strides = [1, 1]} : vector<32x64xf32> to vector<1x64xf32>
    %66 = tpu.concatenate %64, %65 in 0 : vector<1x64xf32>, vector<1x64xf32> -> vector<2x64xf32>
    %67 = vector.extract_strided_slice %29 {offsets = [7, 0], sizes = [1, 64], strides = [1, 1]} : vector<32x64xf32> to vector<1x64xf32>
    %68 = vector.extract_strided_slice %29 {offsets = [23, 0], sizes = [1, 64], strides = [1, 1]} : vector<32x64xf32> to vector<1x64xf32>
    %69 = tpu.concatenate %67, %68 in 0 : vector<1x64xf32>, vector<1x64xf32> -> vector<2x64xf32>
    %70 = arith.maximumf %66, %69 : vector<2x64xf32>
    %c3 = arith.constant 3 : index
    %c0_34 = arith.constant 0 : index
    %c0_35 = arith.constant 0 : index
    %71 = vector.load %arg4[%c3, %c0_34, %c0_35] : memref<8x64x2xf32, #tpu.memory_space<vmem>>, vector<1x64x2xf32>
    %72 = vector.shape_cast %71 : vector<1x64x2xf32> to vector<64x2xf32>
    %cst_36 = arith.constant dense<0.000000e+00> : vector<2x2xf32>
    %73 = tpu.matmul %70, %72, %cst_36 {dimension_numbers = #tpu.dot_dimension_numbers<[1], [0], [0], [1], [0, 0, 1, 1], [], []>} : vector<2x64xf32>, vector<64x2xf32>, vector<2x2xf32> -> vector<2x2xf32>
    %74 = arith.addf %63, %73 : vector<2x2xf32>
    %75 = vector.extract_strided_slice %29 {offsets = [8, 0], sizes = [1, 64], strides = [1, 1]} : vector<32x64xf32> to vector<1x64xf32>
    %76 = vector.extract_strided_slice %29 {offsets = [24, 0], sizes = [1, 64], strides = [1, 1]} : vector<32x64xf32> to vector<1x64xf32>
    %77 = tpu.concatenate %75, %76 in 0 : vector<1x64xf32>, vector<1x64xf32> -> vector<2x64xf32>
    %78 = vector.extract_strided_slice %29 {offsets = [9, 0], sizes = [1, 64], strides = [1, 1]} : vector<32x64xf32> to vector<1x64xf32>
    %79 = vector.extract_strided_slice %29 {offsets = [25, 0], sizes = [1, 64], strides = [1, 1]} : vector<32x64xf32> to vector<1x64xf32>
    %80 = tpu.concatenate %78, %79 in 0 : vector<1x64xf32>, vector<1x64xf32> -> vector<2x64xf32>
    %81 = arith.maximumf %77, %80 : vector<2x64xf32>
    %c4 = arith.constant 4 : index
    %c0_37 = arith.constant 0 : index
    %c0_38 = arith.constant 0 : index
    %82 = vector.load %arg4[%c4, %c0_37, %c0_38] : memref<8x64x2xf32, #tpu.memory_space<vmem>>, vector<1x64x2xf32>
    %83 = vector.shape_cast %82 : vector<1x64x2xf32> to vector<64x2xf32>
    %cst_39 = arith.constant dense<0.000000e+00> : vector<2x2xf32>
    %84 = tpu.matmul %81, %83, %cst_39 {dimension_numbers = #tpu.dot_dimension_numbers<[1], [0], [0], [1], [0, 0, 1, 1], [], []>} : vector<2x64xf32>, vector<64x2xf32>, vector<2x2xf32> -> vector<2x2xf32>
    %85 = arith.addf %74, %84 : vector<2x2xf32>
    %86 = vector.extract_strided_slice %29 {offsets = [10, 0], sizes = [1, 64], strides = [1, 1]} : vector<32x64xf32> to vector<1x64xf32>
    %87 = vector.extract_strided_slice %29 {offsets = [26, 0], sizes = [1, 64], strides = [1, 1]} : vector<32x64xf32> to vector<1x64xf32>
    %88 = tpu.concatenate %86, %87 in 0 : vector<1x64xf32>, vector<1x64xf32> -> vector<2x64xf32>
    %89 = vector.extract_strided_slice %29 {offsets = [11, 0], sizes = [1, 64], strides = [1, 1]} : vector<32x64xf32> to vector<1x64xf32>
    %90 = vector.extract_strided_slice %29 {offsets = [27, 0], sizes = [1, 64], strides = [1, 1]} : vector<32x64xf32> to vector<1x64xf32>
    %91 = tpu.concatenate %89, %90 in 0 : vector<1x64xf32>, vector<1x64xf32> -> vector<2x64xf32>
    %92 = arith.maximumf %88, %91 : vector<2x64xf32>
    %c5 = arith.constant 5 : index
    %c0_40 = arith.constant 0 : index
    %c0_41 = arith.constant 0 : index
    %93 = vector.load %arg4[%c5, %c0_40, %c0_41] : memref<8x64x2xf32, #tpu.memory_space<vmem>>, vector<1x64x2xf32>
    %94 = vector.shape_cast %93 : vector<1x64x2xf32> to vector<64x2xf32>
    %cst_42 = arith.constant dense<0.000000e+00> : vector<2x2xf32>
    %95 = tpu.matmul %92, %94, %cst_42 {dimension_numbers = #tpu.dot_dimension_numbers<[1], [0], [0], [1], [0, 0, 1, 1], [], []>} : vector<2x64xf32>, vector<64x2xf32>, vector<2x2xf32> -> vector<2x2xf32>
    %96 = arith.addf %85, %95 : vector<2x2xf32>
    %97 = vector.extract_strided_slice %29 {offsets = [12, 0], sizes = [1, 64], strides = [1, 1]} : vector<32x64xf32> to vector<1x64xf32>
    %98 = vector.extract_strided_slice %29 {offsets = [28, 0], sizes = [1, 64], strides = [1, 1]} : vector<32x64xf32> to vector<1x64xf32>
    %99 = tpu.concatenate %97, %98 in 0 : vector<1x64xf32>, vector<1x64xf32> -> vector<2x64xf32>
    %100 = vector.extract_strided_slice %29 {offsets = [13, 0], sizes = [1, 64], strides = [1, 1]} : vector<32x64xf32> to vector<1x64xf32>
    %101 = vector.extract_strided_slice %29 {offsets = [29, 0], sizes = [1, 64], strides = [1, 1]} : vector<32x64xf32> to vector<1x64xf32>
    %102 = tpu.concatenate %100, %101 in 0 : vector<1x64xf32>, vector<1x64xf32> -> vector<2x64xf32>
    %103 = arith.maximumf %99, %102 : vector<2x64xf32>
    %c6 = arith.constant 6 : index
    %c0_43 = arith.constant 0 : index
    %c0_44 = arith.constant 0 : index
    %104 = vector.load %arg4[%c6, %c0_43, %c0_44] : memref<8x64x2xf32, #tpu.memory_space<vmem>>, vector<1x64x2xf32>
    %105 = vector.shape_cast %104 : vector<1x64x2xf32> to vector<64x2xf32>
    %cst_45 = arith.constant dense<0.000000e+00> : vector<2x2xf32>
    %106 = tpu.matmul %103, %105, %cst_45 {dimension_numbers = #tpu.dot_dimension_numbers<[1], [0], [0], [1], [0, 0, 1, 1], [], []>} : vector<2x64xf32>, vector<64x2xf32>, vector<2x2xf32> -> vector<2x2xf32>
    %107 = arith.addf %96, %106 : vector<2x2xf32>
    %108 = vector.extract_strided_slice %29 {offsets = [14, 0], sizes = [1, 64], strides = [1, 1]} : vector<32x64xf32> to vector<1x64xf32>
    %109 = vector.extract_strided_slice %29 {offsets = [30, 0], sizes = [1, 64], strides = [1, 1]} : vector<32x64xf32> to vector<1x64xf32>
    %110 = tpu.concatenate %108, %109 in 0 : vector<1x64xf32>, vector<1x64xf32> -> vector<2x64xf32>
    %111 = vector.extract_strided_slice %29 {offsets = [15, 0], sizes = [1, 64], strides = [1, 1]} : vector<32x64xf32> to vector<1x64xf32>
    %112 = vector.extract_strided_slice %29 {offsets = [31, 0], sizes = [1, 64], strides = [1, 1]} : vector<32x64xf32> to vector<1x64xf32>
    %113 = tpu.concatenate %111, %112 in 0 : vector<1x64xf32>, vector<1x64xf32> -> vector<2x64xf32>
    %114 = arith.maximumf %110, %113 : vector<2x64xf32>
    %c7 = arith.constant 7 : index
    %c0_46 = arith.constant 0 : index
    %c0_47 = arith.constant 0 : index
    %115 = vector.load %arg4[%c7, %c0_46, %c0_47] : memref<8x64x2xf32, #tpu.memory_space<vmem>>, vector<1x64x2xf32>
    %116 = vector.shape_cast %115 : vector<1x64x2xf32> to vector<64x2xf32>
    %cst_48 = arith.constant dense<0.000000e+00> : vector<2x2xf32>
    %117 = tpu.matmul %114, %116, %cst_48 {dimension_numbers = #tpu.dot_dimension_numbers<[1], [0], [0], [1], [0, 0, 1, 1], [], []>} : vector<2x64xf32>, vector<64x2xf32>, vector<2x2xf32> -> vector<2x2xf32>
    %118 = arith.addf %107, %117 : vector<2x2xf32>
    %c0_49 = arith.constant 0 : index
    %c0_50 = arith.constant 0 : index
    %119 = vector.load %arg5[%c0_49, %c0_50] : memref<1x2xf32, #tpu.memory_space<vmem>>, vector<1x2xf32>
    %120 = vector.broadcast %119 : vector<1x2xf32> to vector<2x2xf32>
    %121 = arith.addf %118, %120 : vector<2x2xf32>
    %c0_51 = arith.constant 0 : index
    %c0_52 = arith.constant 0 : index
    %122 = vector.load %arg6[%c0_51, %c0_52] : memref<2x2xf32, #tpu.memory_space<vmem>>, vector<2x2xf32>
    tpu.vector_store %arg6[%c0_51, %c0_52], %121 {strides = array<i32>} : memref<2x2xf32, #tpu.memory_space<vmem>>, vector<2x2xf32>,
    return
  }
  func.func @transform_0(%arg0: i32) -> (i32, i32) {
    %c0_i32 = arith.constant 0 : i32
    %c0_i32_0 = arith.constant 0 : i32
    %c0_i32_1 = arith.constant 0 : i32
    return %c0_i32, %c0_i32_0 : i32, i32
  }
  func.func @transform_1(%arg0: i32) -> (i32, i32, i32) {
    %c0_i32 = arith.constant 0 : i32
    %c0_i32_0 = arith.constant 0 : i32
    %c0_i32_1 = arith.constant 0 : i32
    %c0_i32_2 = arith.constant 0 : i32
    return %c0_i32, %c0_i32_0, %c0_i32_1 : i32, i32, i32
  }
  func.func @transform_2(%arg0: i32) -> (i32, i32) {
    %c0_i32 = arith.constant 0 : i32
    %c0_i32_0 = arith.constant 0 : i32
    %c0_i32_1 = arith.constant 0 : i32
    return %c0_i32, %c0_i32_0 : i32, i32
  }
  func.func @transform_3(%arg0: i32) -> (i32, i32, i32) {
    %c0_i32 = arith.constant 0 : i32
    %c0_i32_0 = arith.constant 0 : i32
    %c0_i32_1 = arith.constant 0 : i32
    %c0_i32_2 = arith.constant 0 : i32
    return %c0_i32, %c0_i32_0, %c0_i32_1 : i32, i32, i32
  }
  func.func @transform_4(%arg0: i32) -> (i32, i32) {
    %c0_i32 = arith.constant 0 : i32
    %c0_i32_0 = arith.constant 0 : i32
    %c0_i32_1 = arith.constant 0 : i32
    return %c0_i32, %c0_i32_0 : i32, i32
  }
  func.func @transform_5(%arg0: i32) -> (i32, i32) {
    %c0_i32 = arith.constant 0 : i32
    %c0_i32_0 = arith.constant 0 : i32
    %c0_i32_1 = arith.constant 0 : i32
    return %c0_i32, %c0_i32_0 : i32, i32
  }
}

</mosaic_0001>

<llo_original>
// kernel: generic_network_forward.1
$region0: #{generic_network_forward.1}
  #allocation0 [shape = 'u32[]', space=smem, size = 0x4, offset = 0x4, fixed_abs, tag = 'smem constant byte address 0x4 - core index']
  #allocation1 [shape = 'u32[144,128]{1,0:T(1,128)}', space=vmem, size = 0x12000, scoped, tag = 'internal scratch']
  %s0 = inlined_call_operand.vmem [shape: f32[36,72], index: 0, kind: input, shape index: {}]
  %s1 = inlined_call_operand.vmem [shape: f32[3,72,128], index: 1, kind: input, shape index: {}]
  %s2 = inlined_call_operand.vmem [shape: f32[1,128], index: 2, kind: input, shape index: {}]
  %s3 = inlined_call_operand.vmem [shape: f32[8,64,2], index: 3, kind: input, shape index: {}]
  %s4 = inlined_call_operand.vmem [shape: f32[1,2], index: 4, kind: input, shape index: {}]
  %s5 = inlined_call_operand.hbm [shape: f32[2,2], index: 5, kind: output, shape index: {}]
  %s6 = sld [smem:[#allocation0]]
  $region30: #{generic_network_forward.1} parent=0
    _
  %s8 = ssub.s32 1, %s6
  %s9 = scalar_select 0, %s8, %s6
  $region1: #{generic_network_forward.1} parent=0
    #allocation2 [shape = 'u8[1024]{0}', space=vmem, size = 0x400, scoped, tag = 'output window, operand 0, single buffered']
    #allocation3 [shape = 's32[1]{0}', space=sflag, size = 0x4, scoped, tag = 'scoped memory for generic_network_forward.1']
    %10 = vsyncpa [#allocation3], 0
    // Predicated region
    $region2: #{generic_network_forward.1} parent=1 // pred_check
      _
    $region3: #{generic_network_forward.1} parent=1 // pred_check_branch
      %12 = sbr.rel (0) target = $region5
    $region4: #{generic_network_forward.1} parent=1 // pred_region
      _
    $region5: #{generic_network_forward.1} parent=1 // pred_fallthru
      _
    // Predicated region
    $region6: #{generic_network_forward.1} parent=1 // pred_check
      _
    $region7: #{generic_network_forward.1} parent=1 // pred_check_branch
      %14 = sbr.rel (0) target = $region9
    $region8: #{generic_network_forward.1} parent=1 // pred_region
      _
    $region9: #{generic_network_forward.1} parent=1 // pred_fallthru
      _
    // Predicated region
    $region10: #{generic_network_forward.1} parent=1 // pred_check
      _
    $region11: #{generic_network_forward.1} parent=1 // pred_check_branch
      %16 = sbr.rel (0) target = $region13
    $region12: #{generic_network_forward.1} parent=1 // pred_region
      _
    $region13: #{generic_network_forward.1} parent=1 // pred_fallthru
      _
    // Predicated region
    $region14: #{generic_network_forward.1} parent=1 // pred_check
      _
    $region15: #{generic_network_forward.1} parent=1 // pred_check_branch
      %18 = sbr.rel (0) target = $region17
    $region16: #{generic_network_forward.1} parent=1 // pred_region
      _
    $region17: #{generic_network_forward.1} parent=1 // pred_fallthru
      _
    // Predicated region
    $region18: #{generic_network_forward.1} parent=1 // pred_check
      _
    $region19: #{generic_network_forward.1} parent=1 // pred_check_branch
      %20 = sbr.rel (0) target = $region21
    $region20: #{generic_network_forward.1} parent=1 // pred_region
      _
    $region21: #{generic_network_forward.1} parent=1 // pred_fallthru
      _
    %v21 = vld [vmem:[%s0] sm:$0xff]
    %v22 = vld [vmem:[%s0 + $0x8] sm:$0xff]
    %v23 = vld [vmem:[%s0 + $0x12] sm:$0xff]
    %v24 = vld [vmem:[%s0 + $0x1a] sm:$0xff]
    %v25 = vld [vmem:[%s1] sm:$0xff]
    %v26 = vld [vmem:[%s1 + $0x8] sm:$0xff]
    %v27 = vld [vmem:[%s1 + $0x10] sm:$0xff]
    %v28 = vld [vmem:[%s1 + $0x18] sm:$0xff]
    %v29 = vld [vmem:[%s1 + $0x20] sm:$0xff]
    %v30 = vld [vmem:[%s1 + $0x28] sm:$0xff]
    %v31 = vld [vmem:[%s1 + $0x30] sm:$0xff]
    %v32 = vld [vmem:[%s1 + $0x38] sm:$0xff]
    %v33 = vld [vmem:[%s1 + $0x40] sm:$0xff]
    %v34 = vld [vmem:[%s0 + $0x1] sm:$0xff]
    %v35 = vld [vmem:[%s0 + $0x9] sm:$0xff]
    %v36 = vld [vmem:[%s0 + $0x13] sm:$0xff]
    %v37 = vld [vmem:[%s0 + $0x1b] sm:$0xff]
    %s38 = scalar_lea.vmem %s1, 72
    %v39 = vld [vmem:[%s38] sm:$0xff]
    %v40 = vld [vmem:[%s38 + $0x8] sm:$0xff]
    %v41 = vld [vmem:[%s38 + $0x10] sm:$0xff]
    %v42 = vld [vmem:[%s38 + $0x18] sm:$0xff]
    %v43 = vld [vmem:[%s38 + $0x20] sm:$0xff]
    %v44 = vld [vmem:[%s38 + $0x28] sm:$0xff]
    %v45 = vld [vmem:[%s38 + $0x30] sm:$0xff]
    %v46 = vld [vmem:[%s38 + $0x38] sm:$0xff]
    %v47 = vld [vmem:[%s38 + $0x40] sm:$0xff]
    %vm48 = vcmask 588800
    %v50 = vsel %vm48, %v34, 0
    %v53 = vsel %vm48, %v35, 0
    %v56 = vsel %vm48, %v36, 0
    %v59 = vsel %vm48, %v37, 0
    %61 = vmatprep.subr.mxu0 0.0
    %62 = vmatpush1.msra.mxu0 0.0
    %63 = vmatprep.subr.mxu0 0.0
    %64 = vmatpush1.msra.mxu0 0.0
    %65 = vmatprep.subr.mxu0 0.0
    %66 = vmatpush1.msra.mxu0 0.0
    %67 = vmatprep.subr.mxu0 0.0
    %68 = vmatpush1.msra.mxu0 0.0
    %69 = vmatprep.subr.mxu0 0.0
    %70 = vmatpush1.msra.mxu0 0.0
    %71 = vmatprep.subr.mxu0 0.0
    %72 = vmatpush1.msra.mxu0 0.0
    %73 = vmatprep.subr.mxu0 0.0
    %74 = vmatpush1.msra.mxu0 0.0
    %75 = vmatprep.subr.mxu0 0.0
    %76 = vmatpush1.msra.mxu0 %v47
    %77 = vmatprep.subr.mxu0 0.0
    %78 = vmatpush1.msra.mxu0 %v46
    %79 = vmatprep.subr.mxu0 0.0
    %80 = vmatpush1.msra.mxu0 %v45
    %81 = vmatprep.subr.mxu0 0.0
    %82 = vmatpush1.msra.mxu0 %v44
    %83 = vmatprep.subr.mxu0 0.0
    %84 = vmatpush1.msra.mxu0 %v43
    %85 = vmatprep.subr.mxu0 0.0
    %86 = vmatpush1.msra.mxu0 %v42
    %87 = vmatprep.subr.mxu0 0.0
    %88 = vmatpush1.msra.mxu0 %v41
    %89 = vmatprep.subr.mxu0 0.0
    %90 = vmatpush1.msra.mxu0 %v40
    %91 = vmatprep.subr.mxu0 0.0
    %92 = vmatpush1.msra.mxu0 %v39
    %93 = vmatprep.subr.mxu0 0.0
    %94 = vmatpush2.msra.mxu0 0.0
    %95 = vmatprep.subr.mxu0 0.0
    %96 = vmatpush2.msra.mxu0 0.0
    %97 = vmatprep.subr.mxu0 0.0
    %98 = vmatpush2.msra.mxu0 0.0
    %99 = vmatprep.subr.mxu0 0.0
    %100 = vmatpush2.msra.mxu0 0.0
    %101 = vmatprep.subr.mxu0 0.0
    %102 = vmatpush2.msra.mxu0 0.0
    %103 = vmatprep.subr.mxu0 0.0
    %104 = vmatpush2.msra.mxu0 0.0
    %105 = vmatprep.subr.mxu0 0.0
    %106 = vmatpush2.msra.mxu0 0.0
    %107 = vmatprep.subr.mxu0 0.0
    %108 = vmatpush2.msra.mxu0 0.0
    %109 = vmatprep.subr.mxu0 0.0
    %110 = vmatpush2.msra.mxu0 0.0
    %111 = vmatprep.subr.mxu0 0.0
    %112 = vmatpush2.msra.mxu0 0.0
    %113 = vmatprep.subr.mxu0 0.0
    %114 = vmatpush2.msra.mxu0 0.0
    %115 = vmatprep.subr.mxu0 0.0
    %116 = vmatpush2.msra.mxu0 0.0
    %117 = vmatprep.subr.mxu0 0.0
    %118 = vmatpush2.msra.mxu0 0.0
    %119 = vmatprep.subr.mxu0 0.0
    %120 = vmatpush2.msra.mxu0 0.0
    %121 = vmatprep.subr.mxu0 0.0
    %122 = vmatpush2.msra.mxu0 0.0
    %123 = vmatprep.subr.mxu0 0.0
    %124 = vmatpush2.msra.mxu0 0.0
    %125 = vmatprep.mubr.f32.mxu0 0.0
    %126 = vmatmul.mubr.f32.gmra.mxu0 %v50
    %v127 = vpop.f32.mrf.mxu0
    %v128 = vadd.f32 0.0, %v127
    %v129 = vpop.f32.mrf.mxu0
    %130 = vmatprep.mubr.f32.mxu0 0.0
    %131 = vmatmul.mubr.f32.gmra.mxu0 %v53
    %v132 = vpop.f32.mrf.mxu0
    %v133 = vadd.f32 0.0, %v132
    %v134 = vpop.f32.mrf.mxu0
    %135 = vmatprep.mubr.f32.mxu0 0.0
    %136 = vmatmul.mubr.f32.gmra.mxu0 %v56
    %v137 = vpop.f32.mrf.mxu0
    %v138 = vadd.f32 0.0, %v137
    %v139 = vpop.f32.mrf.mxu0
    %140 = vmatprep.mubr.f32.mxu0 0.0
    %141 = vmatmul.mubr.f32.gmra.mxu0 %v59
    %v142 = vpop.f32.mrf.mxu0
    %v143 = vadd.f32 0.0, %v142
    %v144 = vpop.f32.mrf.mxu0
    %145 = vdwg.mxu0
    %v147 = vsel %vm48, %v21, 0
    %v150 = vsel %vm48, %v22, 0
    %v153 = vsel %vm48, %v23, 0
    %v156 = vsel %vm48, %v24, 0
    %158 = vmatprep.subr.mxu0 0.0
    %159 = vmatpush1.msra.mxu0 0.0
    %160 = vmatprep.subr.mxu0 0.0
    %161 = vmatpush1.msra.mxu0 0.0
    %162 = vmatprep.subr.mxu0 0.0
    %163 = vmatpush1.msra.mxu0 0.0
    %164 = vmatprep.subr.mxu0 0.0
    %165 = vmatpush1.msra.mxu0 0.0
    %166 = vmatprep.subr.mxu0 0.0
    %167 = vmatpush1.msra.mxu0 0.0
    %168 = vmatprep.subr.mxu0 0.0
    %169 = vmatpush1.msra.mxu0 0.0
    %170 = vmatprep.subr.mxu0 0.0
    %171 = vmatpush1.msra.mxu0 0.0
    %172 = vmatprep.subr.mxu0 0.0
    %173 = vmatpush1.msra.mxu0 %v33
    %174 = vmatprep.subr.mxu0 0.0
    %175 = vmatpush1.msra.mxu0 %v32
    %176 = vmatprep.subr.mxu0 0.0
    %177 = vmatpush1.msra.mxu0 %v31
    %178 = vmatprep.subr.mxu0 0.0
    %179 = vmatpush1.msra.mxu0 %v30
    %180 = vmatprep.subr.mxu0 0.0
    %181 = vmatpush1.msra.mxu0 %v29
    %182 = vmatprep.subr.mxu0 0.0
    %183 = vmatpush1.msra.mxu0 %v28
    %184 = vmatprep.subr.mxu0 0.0
    %185 = vmatpush1.msra.mxu0 %v27
    %186 = vmatprep.subr.mxu0 0.0
    %187 = vmatpush1.msra.mxu0 %v26
    %188 = vmatprep.subr.mxu0 0.0
    %189 = vmatpush1.msra.mxu0 %v25
    %190 = vmatprep.subr.mxu0 0.0
    %191 = vmatpush2.msra.mxu0 0.0
    %192 = vmatprep.subr.mxu0 0.0
    %193 = vmatpush2.msra.mxu0 0.0
    %194 = vmatprep.subr.mxu0 0.0
    %195 = vmatpush2.msra.mxu0 0.0
    %196 = vmatprep.subr.mxu0 0.0
    %197 = vmatpush2.msra.mxu0 0.0
    %198 = vmatprep.subr.mxu0 0.0
    %199 = vmatpush2.msra.mxu0 0.0
    %200 = vmatprep.subr.mxu0 0.0
    %201 = vmatpush2.msra.mxu0 0.0
    %202 = vmatprep.subr.mxu0 0.0
    %203 = vmatpush2.msra.mxu0 0.0
    %204 = vmatprep.subr.mxu0 0.0
    %205 = vmatpush2.msra.mxu0 0.0
    %206 = vmatprep.subr.mxu0 0.0
    %207 = vmatpush2.msra.mxu0 0.0
    %208 = vmatprep.subr.mxu0 0.0
    %209 = vmatpush2.msra.mxu0 0.0
    %210 = vmatprep.subr.mxu0 0.0
    %211 = vmatpush2.msra.mxu0 0.0
    %212 = vmatprep.subr.mxu0 0.0
    %213 = vmatpush2.msra.mxu0 0.0
    %214 = vmatprep.subr.mxu0 0.0
    %215 = vmatpush2.msra.mxu0 0.0
    %216 = vmatprep.subr.mxu0 0.0
    %217 = vmatpush2.msra.mxu0 0.0
    %218 = vmatprep.subr.mxu0 0.0
    %219 = vmatpush2.msra.mxu0 0.0
    %220 = vmatprep.subr.mxu0 0.0
    %221 = vmatpush2.msra.mxu0 0.0
    %222 = vmatprep.mubr.f32.mxu0 0.0
    %223 = vmatmul.mubr.f32.gmra.mxu0 %v147
    %v224 = vpop.f32.mrf.mxu0
    %v225 = vadd.f32 %v128, %v224
    %v226 = vpop.f32.mrf.mxu0
    %227 = vmatprep.mubr.f32.mxu0 0.0
    %228 = vmatmul.mubr.f32.gmra.mxu0 %v150
    %v229 = vpop.f32.mrf.mxu0
    %v230 = vadd.f32 %v133, %v229
    %v231 = vpop.f32.mrf.mxu0
    %232 = vmatprep.mubr.f32.mxu0 0.0
    %233 = vmatmul.mubr.f32.gmra.mxu0 %v153
    %v234 = vpop.f32.mrf.mxu0
    %v235 = vadd.f32 %v138, %v234
    %v236 = vpop.f32.mrf.mxu0
    %237 = vmatprep.mubr.f32.mxu0 0.0
    %238 = vmatmul.mubr.f32.gmra.mxu0 %v156
    %v239 = vpop.f32.mrf.mxu0
    %v240 = vadd.f32 %v143, %v239
    %v241 = vpop.f32.mrf.mxu0
    %242 = vdwg.mxu0
    %v243 = vld [vmem:[%s0 + $0x2] sm:$0xff]
    %v244 = vld [vmem:[%s0 + $0xa] sm:$0xff]
    %v245 = vld [vmem:[%s0 + $0x14] sm:$0xff]
    %v246 = vld [vmem:[%s0 + $0x1c] sm:$0xff]
    %s247 = scalar_lea.vmem %s1, 144
    %v248 = vld [vmem:[%s247] sm:$0xff]
    %v249 = vld [vmem:[%s247 + $0x8] sm:$0xff]
    %v250 = vld [vmem:[%s247 + $0x10] sm:$0xff]
    %v251 = vld [vmem:[%s247 + $0x18] sm:$0xff]
    %v252 = vld [vmem:[%s247 + $0x20] sm:$0xff]
    %v253 = vld [vmem:[%s247 + $0x28] sm:$0xff]
    %v254 = vld [vmem:[%s247 + $0x30] sm:$0xff]
    %v255 = vld [vmem:[%s247 + $0x38] sm:$0xff]
    %v256 = vld [vmem:[%s247 + $0x40] sm:$0xff]
    %v258 = vsel %vm48, %v243, 0
    %v261 = vsel %vm48, %v244, 0
    %v264 = vsel %vm48, %v245, 0
    %v267 = vsel %vm48, %v246, 0
    %269 = vmatprep.subr.mxu0 0.0
    %270 = vmatpush1.msra.mxu0 0.0
    %271 = vmatprep.subr.mxu0 0.0
    %272 = vmatpush1.msra.mxu0 0.0
    %273 = vmatprep.subr.mxu0 0.0
    %274 = vmatpush1.msra.mxu0 0.0
    %275 = vmatprep.subr.mxu0 0.0
    %276 = vmatpush1.msra.mxu0 0.0
    %277 = vmatprep.subr.mxu0 0.0
    %278 = vmatpush1.msra.mxu0 0.0
    %279 = vmatprep.subr.mxu0 0.0
    %280 = vmatpush1.msra.mxu0 0.0
    %281 = vmatprep.subr.mxu0 0.0
    %282 = vmatpush1.msra.mxu0 0.0
    %283 = vmatprep.subr.mxu0 0.0
    %284 = vmatpush1.msra.mxu0 %v256
    %285 = vmatprep.subr.mxu0 0.0
    %286 = vmatpush1.msra.mxu0 %v255
    %287 = vmatprep.subr.mxu0 0.0
    %288 = vmatpush1.msra.mxu0 %v254
    %289 = vmatprep.subr.mxu0 0.0
    %290 = vmatpush1.msra.mxu0 %v253
    %291 = vmatprep.subr.mxu0 0.0
    %292 = vmatpush1.msra.mxu0 %v252
    %293 = vmatprep.subr.mxu0 0.0
    %294 = vmatpush1.msra.mxu0 %v251
    %295 = vmatprep.subr.mxu0 0.0
    %296 = vmatpush1.msra.mxu0 %v250
    %297 = vmatprep.subr.mxu0 0.0
    %298 = vmatpush1.msra.mxu0 %v249
    %299 = vmatprep.subr.mxu0 0.0
    %300 = vmatpush1.msra.mxu0 %v248
    %301 = vmatprep.subr.mxu0 0.0
    %302 = vmatpush2.msra.mxu0 0.0
    %303 = vmatprep.subr.mxu0 0.0
    %304 = vmatpush2.msra.mxu0 0.0
    %305 = vmatprep.subr.mxu0 0.0
    %306 = vmatpush2.msra.mxu0 0.0
    %307 = vmatprep.subr.mxu0 0.0
    %308 = vmatpush2.msra.mxu0 0.0
    %309 = vmatprep.subr.mxu0 0.0
    %310 = vmatpush2.msra.mxu0 0.0
    %311 = vmatprep.subr.mxu0 0.0
    %312 = vmatpush2.msra.mxu0 0.0
    %313 = vmatprep.subr.mxu0 0.0
    %314 = vmatpush2.msra.mxu0 0.0
    %315 = vmatprep.subr.mxu0 0.0
    %316 = vmatpush2.msra.mxu0 0.0
    %317 = vmatprep.subr.mxu0 0.0
    %318 = vmatpush2.msra.mxu0 0.0
    %319 = vmatprep.subr.mxu0 0.0
    %320 = vmatpush2.msra.mxu0 0.0
    %321 = vmatprep.subr.mxu0 0.0
    %322 = vmatpush2.msra.mxu0 0.0
    %323 = vmatprep.subr.mxu0 0.0
    %324 = vmatpush2.msra.mxu0 0.0
    %325 = vmatprep.subr.mxu0 0.0
    %326 = vmatpush2.msra.mxu0 0.0
    %327 = vmatprep.subr.mxu0 0.0
    %328 = vmatpush2.msra.mxu0 0.0
    %329 = vmatprep.subr.mxu0 0.0
    %330 = vmatpush2.msra.mxu0 0.0
    %331 = vmatprep.subr.mxu0 0.0
    %332 = vmatpush2.msra.mxu0 0.0
    %333 = vmatprep.mubr.f32.mxu0 0.0
    %334 = vmatmul.mubr.f32.gmra.mxu0 %v258
    %v335 = vpop.f32.mrf.mxu0
    %v336 = vadd.f32 0.0, %v335
    %v337 = vpop.f32.mrf.mxu0
    %338 = vmatprep.mubr.f32.mxu0 0.0
    %339 = vmatmul.mubr.f32.gmra.mxu0 %v261
    %v340 = vpop.f32.mrf.mxu0
    %v341 = vadd.f32 0.0, %v340
    %v342 = vpop.f32.mrf.mxu0
    %343 = vmatprep.mubr.f32.mxu0 0.0
    %344 = vmatmul.mubr.f32.gmra.mxu0 %v264
    %v345 = vpop.f32.mrf.mxu0
    %v346 = vadd.f32 0.0, %v345
    %v347 = vpop.f32.mrf.mxu0
    %348 = vmatprep.mubr.f32.mxu0 0.0
    %349 = vmatmul.mubr.f32.gmra.mxu0 %v267
    %v350 = vpop.f32.mrf.mxu0
    %v351 = vadd.f32 0.0, %v350
    %v352 = vpop.f32.mrf.mxu0
    %353 = vdwg.mxu0
    %v354 = vadd.f32 %v225, %v336
    %v355 = vadd.f32 %v230, %v341
    %v356 = vadd.f32 %v235, %v346
    %v357 = vadd.f32 %v240, %v351
    %v358 = vld [vmem:[%s2] sm:$0x1]
    %v360 = vlaneseq
    %v361 = vshrl.u32 %v360, 7
    %v362 = vsub.s32 0, %v361
    %v363 = vrot.slane %v358, %v362
    %v365 = vadd.f32 %v354, %v363
    %v366 = vadd.f32 %v355, %v363
    %v367 = vadd.f32 %v356, %v363
    %v368 = vadd.f32 %v357, %v363
    %v369 = vmax.f32 %v365, 0.0
    %v370 = vmax.f32 %v366, 0.0
    %v371 = vmax.f32 %v367, 0.0
    %v372 = vmax.f32 %v368, 0.0
    %377 = vrot.lane.b32.xlu0 %v369, 64
    %v378 = vpop.permute.xlu0 %377
    %379 = vrot.lane.b32.xlu0 %v370, 64
    %v380 = vpop.permute.xlu0 %379
    %381 = vrot.lane.b32.xlu0 %v371, 64
    %v382 = vpop.permute.xlu0 %381
    %383 = vrot.lane.b32.xlu0 %v372, 64
    %v384 = vpop.permute.xlu0 %383
    %v389 = vmax.f32 %v369, %v378
    %v390 = vmax.f32 %v370, %v380
    %v391 = vmax.f32 %v371, %v382
    %v392 = vmax.f32 %v372, %v384
    %v394 = vrot.slane %v391, 7
    %vm396 = vcmask 1040384
    %v397 = vsel %vm396, %v389, %v394
    %v399 = vrot.slane %v389, 1
    %v401 = vsel %vm396, %v399, %v391
    %v402 = vmax.f32 %v397, %v401
    %v403 = vld [vmem:[%s3] sm:$0xff]
    %v404 = vld [vmem:[%s3 + $0x8] sm:$0xff]
    %v405 = vld [vmem:[%s3 + $0x10] sm:$0xff]
    %v406 = vld [vmem:[%s3 + $0x18] sm:$0xff]
    %v407 = vld [vmem:[%s3 + $0x20] sm:$0xff]
    %v408 = vld [vmem:[%s3 + $0x28] sm:$0xff]
    %v409 = vld [vmem:[%s3 + $0x30] sm:$0xff]
    %v410 = vld [vmem:[%s3 + $0x38] sm:$0xff]
    %v411 = vrot.slane %v389, 2
    %v413 = vrot.slane %v391, 1
    %v415 = vsel %vm396, %v411, %v413
    %v416 = vrot.slane %v389, 3
    %v418 = vrot.slane %v391, 2
    %v420 = vsel %vm396, %v416, %v418
    %v421 = vmax.f32 %v415, %v420
    %s422 = scalar_lea.vmem %s3, 64
    %v423 = vld [vmem:[%s422] sm:$0xff]
    %v424 = vld [vmem:[%s422 + $0x8] sm:$0xff]
    %v425 = vld [vmem:[%s422 + $0x10] sm:$0xff]
    %v426 = vld [vmem:[%s422 + $0x18] sm:$0xff]
    %v427 = vld [vmem:[%s422 + $0x20] sm:$0xff]
    %v428 = vld [vmem:[%s422 + $0x28] sm:$0xff]
    %v429 = vld [vmem:[%s422 + $0x30] sm:$0xff]
    %v430 = vld [vmem:[%s422 + $0x38] sm:$0xff]
    %vm431 = vcmask 523264
    %v433 = vsel %vm431, %v421, 0
    %435 = vmatprep.subr.mxu0 0.0
    %436 = vmatpush1.msra.mxu0 0.0
    %437 = vmatprep.subr.mxu0 0.0
    %438 = vmatpush1.msra.mxu0 0.0
    %439 = vmatprep.subr.mxu0 0.0
    %440 = vmatpush1.msra.mxu0 0.0
    %441 = vmatprep.subr.mxu0 0.0
    %442 = vmatpush1.msra.mxu0 0.0
    %443 = vmatprep.subr.mxu0 0.0
    %444 = vmatpush1.msra.mxu0 0.0
    %445 = vmatprep.subr.mxu0 0.0
    %446 = vmatpush1.msra.mxu0 0.0
    %447 = vmatprep.subr.mxu0 0.0
    %448 = vmatpush1.msra.mxu0 0.0
    %449 = vmatprep.subr.mxu0 0.0
    %450 = vmatpush1.msra.mxu0 0.0
    %451 = vmatprep.subr.mxu0 0.0
    %452 = vmatpush1.msra.mxu0 %v430
    %453 = vmatprep.subr.mxu0 0.0
    %454 = vmatpush1.msra.mxu0 %v429
    %455 = vmatprep.subr.mxu0 0.0
    %456 = vmatpush1.msra.mxu0 %v428
    %457 = vmatprep.subr.mxu0 0.0
    %458 = vmatpush1.msra.mxu0 %v427
    %459 = vmatprep.subr.mxu0 0.0
    %460 = vmatpush1.msra.mxu0 %v426
    %461 = vmatprep.subr.mxu0 0.0
    %462 = vmatpush1.msra.mxu0 %v425
    %463 = vmatprep.subr.mxu0 0.0
    %464 = vmatpush1.msra.mxu0 %v424
    %465 = vmatprep.subr.mxu0 0.0
    %466 = vmatpush1.msra.mxu0 %v423
    %467 = vmatprep.subr.mxu0 0.0
    %468 = vmatpush2.msra.mxu0 0.0
    %469 = vmatprep.subr.mxu0 0.0
    %470 = vmatpush2.msra.mxu0 0.0
    %471 = vmatprep.subr.mxu0 0.0
    %472 = vmatpush2.msra.mxu0 0.0
    %473 = vmatprep.subr.mxu0 0.0
    %474 = vmatpush2.msra.mxu0 0.0
    %475 = vmatprep.subr.mxu0 0.0
    %476 = vmatpush2.msra.mxu0 0.0
    %477 = vmatprep.subr.mxu0 0.0
    %478 = vmatpush2.msra.mxu0 0.0
    %479 = vmatprep.subr.mxu0 0.0
    %480 = vmatpush2.msra.mxu0 0.0
    %481 = vmatprep.subr.mxu0 0.0
    %482 = vmatpush2.msra.mxu0 0.0
    %483 = vmatprep.subr.mxu0 0.0
    %484 = vmatpush2.msra.mxu0 0.0
    %485 = vmatprep.subr.mxu0 0.0
    %486 = vmatpush2.msra.mxu0 0.0
    %487 = vmatprep.subr.mxu0 0.0
    %488 = vmatpush2.msra.mxu0 0.0
    %489 = vmatprep.subr.mxu0 0.0
    %490 = vmatpush2.msra.mxu0 0.0
    %491 = vmatprep.subr.mxu0 0.0
    %492 = vmatpush2.msra.mxu0 0.0
    %493 = vmatprep.subr.mxu0 0.0
    %494 = vmatpush2.msra.mxu0 0.0
    %495 = vmatprep.subr.mxu0 0.0
    %496 = vmatpush2.msra.mxu0 0.0
    %497 = vmatprep.subr.mxu0 0.0
    %498 = vmatpush2.msra.mxu0 0.0
    %499 = vmatprep.mubr.f32.mxu0 0.0
    %500 = vmatmul.mubr.f32.gmra.mxu0 %v433
    %v501 = vpop.f32.mrf.mxu0
    %v502 = vadd.f32 0.0, %v501
    %v503 = vpop.f32.mrf.mxu0
    %504 = vdwg.mxu0
    %v506 = vsel %vm431, %v402, 0
    %508 = vmatprep.subr.mxu0 0.0
    %509 = vmatpush1.msra.mxu0 0.0
    %510 = vmatprep.subr.mxu0 0.0
    %511 = vmatpush1.msra.mxu0 0.0
    %512 = vmatprep.subr.mxu0 0.0
    %513 = vmatpush1.msra.mxu0 0.0
    %514 = vmatprep.subr.mxu0 0.0
    %515 = vmatpush1.msra.mxu0 0.0
    %516 = vmatprep.subr.mxu0 0.0
    %517 = vmatpush1.msra.mxu0 0.0
    %518 = vmatprep.subr.mxu0 0.0
    %519 = vmatpush1.msra.mxu0 0.0
    %520 = vmatprep.subr.mxu0 0.0
    %521 = vmatpush1.msra.mxu0 0.0
    %522 = vmatprep.subr.mxu0 0.0
    %523 = vmatpush1.msra.mxu0 0.0
    %524 = vmatprep.subr.mxu0 0.0
    %525 = vmatpush1.msra.mxu0 %v410
    %526 = vmatprep.subr.mxu0 0.0
    %527 = vmatpush1.msra.mxu0 %v409
    %528 = vmatprep.subr.mxu0 0.0
    %529 = vmatpush1.msra.mxu0 %v408
    %530 = vmatprep.subr.mxu0 0.0
    %531 = vmatpush1.msra.mxu0 %v407
    %532 = vmatprep.subr.mxu0 0.0
    %533 = vmatpush1.msra.mxu0 %v406
    %534 = vmatprep.subr.mxu0 0.0
    %535 = vmatpush1.msra.mxu0 %v405
    %536 = vmatprep.subr.mxu0 0.0
    %537 = vmatpush1.msra.mxu0 %v404
    %538 = vmatprep.subr.mxu0 0.0
    %539 = vmatpush1.msra.mxu0 %v403
    %540 = vmatprep.subr.mxu0 0.0
    %541 = vmatpush2.msra.mxu0 0.0
    %542 = vmatprep.subr.mxu0 0.0
    %543 = vmatpush2.msra.mxu0 0.0
    %544 = vmatprep.subr.mxu0 0.0
    %545 = vmatpush2.msra.mxu0 0.0
    %546 = vmatprep.subr.mxu0 0.0
    %547 = vmatpush2.msra.mxu0 0.0
    %548 = vmatprep.subr.mxu0 0.0
    %549 = vmatpush2.msra.mxu0 0.0
    %550 = vmatprep.subr.mxu0 0.0
    %551 = vmatpush2.msra.mxu0 0.0
    %552 = vmatprep.subr.mxu0 0.0
    %553 = vmatpush2.msra.mxu0 0.0
    %554 = vmatprep.subr.mxu0 0.0
    %555 = vmatpush2.msra.mxu0 0.0
    %556 = vmatprep.subr.mxu0 0.0
    %557 = vmatpush2.msra.mxu0 0.0
    %558 = vmatprep.subr.mxu0 0.0
    %559 = vmatpush2.msra.mxu0 0.0
    %560 = vmatprep.subr.mxu0 0.0
    %561 = vmatpush2.msra.mxu0 0.0
    %562 = vmatprep.subr.mxu0 0.0
    %563 = vmatpush2.msra.mxu0 0.0
    %564 = vmatprep.subr.mxu0 0.0
    %565 = vmatpush2.msra.mxu0 0.0
    %566 = vmatprep.subr.mxu0 0.0
    %567 = vmatpush2.msra.mxu0 0.0
    %568 = vmatprep.subr.mxu0 0.0
    %569 = vmatpush2.msra.mxu0 0.0
    %570 = vmatprep.subr.mxu0 0.0
    %571 = vmatpush2.msra.mxu0 0.0
    %572 = vmatprep.mubr.f32.mxu0 0.0
    %573 = vmatmul.mubr.f32.gmra.mxu0 %v506
    %v574 = vpop.f32.mrf.mxu0
    %v575 = vadd.f32 %v502, %v574
    %v576 = vpop.f32.mrf.mxu0
    %577 = vdwg.mxu0
    %v578 = vrot.slane %v389, 4
    %v580 = vrot.slane %v391, 3
    %v582 = vsel %vm396, %v578, %v580
    %v583 = vrot.slane %v389, 5
    %v585 = vrot.slane %v391, 4
    %v587 = vsel %vm396, %v583, %v585
    %v588 = vmax.f32 %v582, %v587
    %s589 = scalar_lea.vmem %s3, 128
    %v590 = vld [vmem:[%s589] sm:$0xff]
    %v591 = vld [vmem:[%s589 + $0x8] sm:$0xff]
    %v592 = vld [vmem:[%s589 + $0x10] sm:$0xff]
    %v593 = vld [vmem:[%s589 + $0x18] sm:$0xff]
    %v594 = vld [vmem:[%s589 + $0x20] sm:$0xff]
    %v595 = vld [vmem:[%s589 + $0x28] sm:$0xff]
    %v596 = vld [vmem:[%s589 + $0x30] sm:$0xff]
    %v597 = vld [vmem:[%s589 + $0x38] sm:$0xff]
    %v599 = vsel %vm431, %v588, 0
    %601 = vmatprep.subr.mxu0 0.0
    %602 = vmatpush1.msra.mxu0 0.0
    %603 = vmatprep.subr.mxu0 0.0
    %604 = vmatpush1.msra.mxu0 0.0
    %605 = vmatprep.subr.mxu0 0.0
    %606 = vmatpush1.msra.mxu0 0.0
    %607 = vmatprep.subr.mxu0 0.0
    %608 = vmatpush1.msra.mxu0 0.0
    %609 = vmatprep.subr.mxu0 0.0
    %610 = vmatpush1.msra.mxu0 0.0
    %611 = vmatprep.subr.mxu0 0.0
    %612 = vmatpush1.msra.mxu0 0.0
    %613 = vmatprep.subr.mxu0 0.0
    %614 = vmatpush1.msra.mxu0 0.0
    %615 = vmatprep.subr.mxu0 0.0
    %616 = vmatpush1.msra.mxu0 0.0
    %617 = vmatprep.subr.mxu0 0.0
    %618 = vmatpush1.msra.mxu0 %v597
    %619 = vmatprep.subr.mxu0 0.0
    %620 = vmatpush1.msra.mxu0 %v596
    %621 = vmatprep.subr.mxu0 0.0
    %622 = vmatpush1.msra.mxu0 %v595
    %623 = vmatprep.subr.mxu0 0.0
    %624 = vmatpush1.msra.mxu0 %v594
    %625 = vmatprep.subr.mxu0 0.0
    %626 = vmatpush1.msra.mxu0 %v593
    %627 = vmatprep.subr.mxu0 0.0
    %628 = vmatpush1.msra.mxu0 %v592
    %629 = vmatprep.subr.mxu0 0.0
    %630 = vmatpush1.msra.mxu0 %v591
    %631 = vmatprep.subr.mxu0 0.0
    %632 = vmatpush1.msra.mxu0 %v590
    %633 = vmatprep.subr.mxu0 0.0
    %634 = vmatpush2.msra.mxu0 0.0
    %635 = vmatprep.subr.mxu0 0.0
    %636 = vmatpush2.msra.mxu0 0.0
    %637 = vmatprep.subr.mxu0 0.0
    %638 = vmatpush2.msra.mxu0 0.0
    %639 = vmatprep.subr.mxu0 0.0
    %640 = vmatpush2.msra.mxu0 0.0
    %641 = vmatprep.subr.mxu0 0.0
    %642 = vmatpush2.msra.mxu0 0.0
    %643 = vmatprep.subr.mxu0 0.0
    %644 = vmatpush2.msra.mxu0 0.0
    %645 = vmatprep.subr.mxu0 0.0
    %646 = vmatpush2.msra.mxu0 0.0
    %647 = vmatprep.subr.mxu0 0.0
    %648 = vmatpush2.msra.mxu0 0.0
    %649 = vmatprep.subr.mxu0 0.0
    %650 = vmatpush2.msra.mxu0 0.0
    %651 = vmatprep.subr.mxu0 0.0
    %652 = vmatpush2.msra.mxu0 0.0
    %653 = vmatprep.subr.mxu0 0.0
    %654 = vmatpush2.msra.mxu0 0.0
    %655 = vmatprep.subr.mxu0 0.0
    %656 = vmatpush2.msra.mxu0 0.0
    %657 = vmatprep.subr.mxu0 0.0
    %658 = vmatpush2.msra.mxu0 0.0
    %659 = vmatprep.subr.mxu0 0.0
    %660 = vmatpush2.msra.mxu0 0.0
    %661 = vmatprep.subr.mxu0 0.0
    %662 = vmatpush2.msra.mxu0 0.0
    %663 = vmatprep.subr.mxu0 0.0
    %664 = vmatpush2.msra.mxu0 0.0
    %665 = vmatprep.mubr.f32.mxu0 0.0
    %666 = vmatmul.mubr.f32.gmra.mxu0 %v599
    %v667 = vpop.f32.mrf.mxu0
    %v668 = vadd.f32 0.0, %v667
    %v669 = vpop.f32.mrf.mxu0
    %670 = vdwg.mxu0
    %v671 = vadd.f32 %v575, %v668
    %v672 = vrot.slane %v389, 6
    %v674 = vrot.slane %v391, 5
    %v676 = vsel %vm396, %v672, %v674
    %v677 = vrot.slane %v389, 7
    %v679 = vrot.slane %v391, 6
    %v681 = vsel %vm396, %v677, %v679
    %v682 = vmax.f32 %v676, %v681
    %s683 = scalar_lea.vmem %s3, 192
    %v684 = vld [vmem:[%s683] sm:$0xff]
    %v685 = vld [vmem:[%s683 + $0x8] sm:$0xff]
    %v686 = vld [vmem:[%s683 + $0x10] sm:$0xff]
    %v687 = vld [vmem:[%s683 + $0x18] sm:$0xff]
    %v688 = vld [vmem:[%s683 + $0x20] sm:$0xff]
    %v689 = vld [vmem:[%s683 + $0x28] sm:$0xff]
    %v690 = vld [vmem:[%s683 + $0x30] sm:$0xff]
    %v691 = vld [vmem:[%s683 + $0x38] sm:$0xff]
    %v693 = vsel %vm431, %v682, 0
    %695 = vmatprep.subr.mxu0 0.0
    %696 = vmatpush1.msra.mxu0 0.0
    %697 = vmatprep.subr.mxu0 0.0
    %698 = vmatpush1.msra.mxu0 0.0
    %699 = vmatprep.subr.mxu0 0.0
    %700 = vmatpush1.msra.mxu0 0.0
    %701 = vmatprep.subr.mxu0 0.0
    %702 = vmatpush1.msra.mxu0 0.0
    %703 = vmatprep.subr.mxu0 0.0
    %704 = vmatpush1.msra.mxu0 0.0
    %705 = vmatprep.subr.mxu0 0.0
    %706 = vmatpush1.msra.mxu0 0.0
    %707 = vmatprep.subr.mxu0 0.0
    %708 = vmatpush1.msra.mxu0 0.0
    %709 = vmatprep.subr.mxu0 0.0
    %710 = vmatpush1.msra.mxu0 0.0
    %711 = vmatprep.subr.mxu0 0.0
    %712 = vmatpush1.msra.mxu0 %v691
    %713 = vmatprep.subr.mxu0 0.0
    %714 = vmatpush1.msra.mxu0 %v690
    %715 = vmatprep.subr.mxu0 0.0
    %716 = vmatpush1.msra.mxu0 %v689
    %717 = vmatprep.subr.mxu0 0.0
    %718 = vmatpush1.msra.mxu0 %v688
    %719 = vmatprep.subr.mxu0 0.0
    %720 = vmatpush1.msra.mxu0 %v687
    %721 = vmatprep.subr.mxu0 0.0
    %722 = vmatpush1.msra.mxu0 %v686
    %723 = vmatprep.subr.mxu0 0.0
    %724 = vmatpush1.msra.mxu0 %v685
    %725 = vmatprep.subr.mxu0 0.0
    %726 = vmatpush1.msra.mxu0 %v684
    %727 = vmatprep.subr.mxu0 0.0
    %728 = vmatpush2.msra.mxu0 0.0
    %729 = vmatprep.subr.mxu0 0.0
    %730 = vmatpush2.msra.mxu0 0.0
    %731 = vmatprep.subr.mxu0 0.0
    %732 = vmatpush2.msra.mxu0 0.0
    %733 = vmatprep.subr.mxu0 0.0
    %734 = vmatpush2.msra.mxu0 0.0
    %735 = vmatprep.subr.mxu0 0.0
    %736 = vmatpush2.msra.mxu0 0.0
    %737 = vmatprep.subr.mxu0 0.0
    %738 = vmatpush2.msra.mxu0 0.0
    %739 = vmatprep.subr.mxu0 0.0
    %740 = vmatpush2.msra.mxu0 0.0
    %741 = vmatprep.subr.mxu0 0.0
    %742 = vmatpush2.msra.mxu0 0.0
    %743 = vmatprep.subr.mxu0 0.0
    %744 = vmatpush2.msra.mxu0 0.0
    %745 = vmatprep.subr.mxu0 0.0
    %746 = vmatpush2.msra.mxu0 0.0
    %747 = vmatprep.subr.mxu0 0.0
    %748 = vmatpush2.msra.mxu0 0.0
    %749 = vmatprep.subr.mxu0 0.0
    %750 = vmatpush2.msra.mxu0 0.0
    %751 = vmatprep.subr.mxu0 0.0
    %752 = vmatpush2.msra.mxu0 0.0
    %753 = vmatprep.subr.mxu0 0.0
    %754 = vmatpush2.msra.mxu0 0.0
    %755 = vmatprep.subr.mxu0 0.0
    %756 = vmatpush2.msra.mxu0 0.0
    %757 = vmatprep.subr.mxu0 0.0
    %758 = vmatpush2.msra.mxu0 0.0
    %759 = vmatprep.mubr.f32.mxu0 0.0
    %760 = vmatmul.mubr.f32.gmra.mxu0 %v693
    %v761 = vpop.f32.mrf.mxu0
    %v762 = vadd.f32 0.0, %v761
    %v763 = vpop.f32.mrf.mxu0
    %764 = vdwg.mxu0
    %v765 = vadd.f32 %v671, %v762
    %v767 = vrot.slane %v392, 7
    %v769 = vsel %vm396, %v390, %v767
    %v771 = vrot.slane %v390, 1
    %v773 = vsel %vm396, %v771, %v392
    %v774 = vmax.f32 %v769, %v773
    %s775 = scalar_lea.vmem %s3, 256
    %v776 = vld [vmem:[%s775] sm:$0xff]
    %v777 = vld [vmem:[%s775 + $0x8] sm:$0xff]
    %v778 = vld [vmem:[%s775 + $0x10] sm:$0xff]
    %v779 = vld [vmem:[%s775 + $0x18] sm:$0xff]
    %v780 = vld [vmem:[%s775 + $0x20] sm:$0xff]
    %v781 = vld [vmem:[%s775 + $0x28] sm:$0xff]
    %v782 = vld [vmem:[%s775 + $0x30] sm:$0xff]
    %v783 = vld [vmem:[%s775 + $0x38] sm:$0xff]
    %v785 = vsel %vm431, %v774, 0
    %787 = vmatprep.subr.mxu0 0.0
    %788 = vmatpush1.msra.mxu0 0.0
    %789 = vmatprep.subr.mxu0 0.0
    %790 = vmatpush1.msra.mxu0 0.0
    %791 = vmatprep.subr.mxu0 0.0
    %792 = vmatpush1.msra.mxu0 0.0
    %793 = vmatprep.subr.mxu0 0.0
    %794 = vmatpush1.msra.mxu0 0.0
    %795 = vmatprep.subr.mxu0 0.0
    %796 = vmatpush1.msra.mxu0 0.0
    %797 = vmatprep.subr.mxu0 0.0
    %798 = vmatpush1.msra.mxu0 0.0
    %799 = vmatprep.subr.mxu0 0.0
    %800 = vmatpush1.msra.mxu0 0.0
    %801 = vmatprep.subr.mxu0 0.0
    %802 = vmatpush1.msra.mxu0 0.0
    %803 = vmatprep.subr.mxu0 0.0
    %804 = vmatpush1.msra.mxu0 %v783
    %805 = vmatprep.subr.mxu0 0.0
    %806 = vmatpush1.msra.mxu0 %v782
    %807 = vmatprep.subr.mxu0 0.0
    %808 = vmatpush1.msra.mxu0 %v781
    %809 = vmatprep.subr.mxu0 0.0
    %810 = vmatpush1.msra.mxu0 %v780
    %811 = vmatprep.subr.mxu0 0.0
    %812 = vmatpush1.msra.mxu0 %v779
    %813 = vmatprep.subr.mxu0 0.0
    %814 = vmatpush1.msra.mxu0 %v778
    %815 = vmatprep.subr.mxu0 0.0
    %816 = vmatpush1.msra.mxu0 %v777
    %817 = vmatprep.subr.mxu0 0.0
    %818 = vmatpush1.msra.mxu0 %v776
    %819 = vmatprep.subr.mxu0 0.0
    %820 = vmatpush2.msra.mxu0 0.0
    %821 = vmatprep.subr.mxu0 0.0
    %822 = vmatpush2.msra.mxu0 0.0
    %823 = vmatprep.subr.mxu0 0.0
    %824 = vmatpush2.msra.mxu0 0.0
    %825 = vmatprep.subr.mxu0 0.0
    %826 = vmatpush2.msra.mxu0 0.0
    %827 = vmatprep.subr.mxu0 0.0
    %828 = vmatpush2.msra.mxu0 0.0
    %829 = vmatprep.subr.mxu0 0.0
    %830 = vmatpush2.msra.mxu0 0.0
    %831 = vmatprep.subr.mxu0 0.0
    %832 = vmatpush2.msra.mxu0 0.0
    %833 = vmatprep.subr.mxu0 0.0
    %834 = vmatpush2.msra.mxu0 0.0
    %835 = vmatprep.subr.mxu0 0.0
    %836 = vmatpush2.msra.mxu0 0.0
    %837 = vmatprep.subr.mxu0 0.0
    %838 = vmatpush2.msra.mxu0 0.0
    %839 = vmatprep.subr.mxu0 0.0
    %840 = vmatpush2.msra.mxu0 0.0
    %841 = vmatprep.subr.mxu0 0.0
    %842 = vmatpush2.msra.mxu0 0.0
    %843 = vmatprep.subr.mxu0 0.0
    %844 = vmatpush2.msra.mxu0 0.0
    %845 = vmatprep.subr.mxu0 0.0
    %846 = vmatpush2.msra.mxu0 0.0
    %847 = vmatprep.subr.mxu0 0.0
    %848 = vmatpush2.msra.mxu0 0.0
    %849 = vmatprep.subr.mxu0 0.0
    %850 = vmatpush2.msra.mxu0 0.0
    %851 = vmatprep.mubr.f32.mxu0 0.0
    %852 = vmatmul.mubr.f32.gmra.mxu0 %v785
    %v853 = vpop.f32.mrf.mxu0
    %v854 = vadd.f32 0.0, %v853
    %v855 = vpop.f32.mrf.mxu0
    %856 = vdwg.mxu0
    %v857 = vadd.f32 %v765, %v854
    %v858 = vrot.slane %v390, 2
    %v860 = vrot.slane %v392, 1
    %v862 = vsel %vm396, %v858, %v860
    %v863 = vrot.slane %v390, 3
    %v865 = vrot.slane %v392, 2
    %v867 = vsel %vm396, %v863, %v865
    %v868 = vmax.f32 %v862, %v867
    %s869 = scalar_lea.vmem %s3, 320
    %v870 = vld [vmem:[%s869] sm:$0xff]
    %v871 = vld [vmem:[%s869 + $0x8] sm:$0xff]
    %v872 = vld [vmem:[%s869 + $0x10] sm:$0xff]
    %v873 = vld [vmem:[%s869 + $0x18] sm:$0xff]
    %v874 = vld [vmem:[%s869 + $0x20] sm:$0xff]
    %v875 = vld [vmem:[%s869 + $0x28] sm:$0xff]
    %v876 = vld [vmem:[%s869 + $0x30] sm:$0xff]
    %v877 = vld [vmem:[%s869 + $0x38] sm:$0xff]
    %v879 = vsel %vm431, %v868, 0
    %881 = vmatprep.subr.mxu0 0.0
    %882 = vmatpush1.msra.mxu0 0.0
    %883 = vmatprep.subr.mxu0 0.0
    %884 = vmatpush1.msra.mxu0 0.0
    %885 = vmatprep.subr.mxu0 0.0
    %886 = vmatpush1.msra.mxu0 0.0
    %887 = vmatprep.subr.mxu0 0.0
    %888 = vmatpush1.msra.mxu0 0.0
    %889 = vmatprep.subr.mxu0 0.0
    %890 = vmatpush1.msra.mxu0 0.0
    %891 = vmatprep.subr.mxu0 0.0
    %892 = vmatpush1.msra.mxu0 0.0
    %893 = vmatprep.subr.mxu0 0.0
    %894 = vmatpush1.msra.mxu0 0.0
    %895 = vmatprep.subr.mxu0 0.0
    %896 = vmatpush1.msra.mxu0 0.0
    %897 = vmatprep.subr.mxu0 0.0
    %898 = vmatpush1.msra.mxu0 %v877
    %899 = vmatprep.subr.mxu0 0.0
    %900 = vmatpush1.msra.mxu0 %v876
    %901 = vmatprep.subr.mxu0 0.0
    %902 = vmatpush1.msra.mxu0 %v875
    %903 = vmatprep.subr.mxu0 0.0
    %904 = vmatpush1.msra.mxu0 %v874
    %905 = vmatprep.subr.mxu0 0.0
    %906 = vmatpush1.msra.mxu0 %v873
    %907 = vmatprep.subr.mxu0 0.0
    %908 = vmatpush1.msra.mxu0 %v872
    %909 = vmatprep.subr.mxu0 0.0
    %910 = vmatpush1.msra.mxu0 %v871
    %911 = vmatprep.subr.mxu0 0.0
    %912 = vmatpush1.msra.mxu0 %v870
    %913 = vmatprep.subr.mxu0 0.0
    %914 = vmatpush2.msra.mxu0 0.0
    %915 = vmatprep.subr.mxu0 0.0
    %916 = vmatpush2.msra.mxu0 0.0
    %917 = vmatprep.subr.mxu0 0.0
    %918 = vmatpush2.msra.mxu0 0.0
    %919 = vmatprep.subr.mxu0 0.0
    %920 = vmatpush2.msra.mxu0 0.0
    %921 = vmatprep.subr.mxu0 0.0
    %922 = vmatpush2.msra.mxu0 0.0
    %923 = vmatprep.subr.mxu0 0.0
    %924 = vmatpush2.msra.mxu0 0.0
    %925 = vmatprep.subr.mxu0 0.0
    %926 = vmatpush2.msra.mxu0 0.0
    %927 = vmatprep.subr.mxu0 0.0
    %928 = vmatpush2.msra.mxu0 0.0
    %929 = vmatprep.subr.mxu0 0.0
    %930 = vmatpush2.msra.mxu0 0.0
    %931 = vmatprep.subr.mxu0 0.0
    %932 = vmatpush2.msra.mxu0 0.0
    %933 = vmatprep.subr.mxu0 0.0
    %934 = vmatpush2.msra.mxu0 0.0
    %935 = vmatprep.subr.mxu0 0.0
    %936 = vmatpush2.msra.mxu0 0.0
    %937 = vmatprep.subr.mxu0 0.0
    %938 = vmatpush2.msra.mxu0 0.0
    %939 = vmatprep.subr.mxu0 0.0
    %940 = vmatpush2.msra.mxu0 0.0
    %941 = vmatprep.subr.mxu0 0.0
    %942 = vmatpush2.msra.mxu0 0.0
    %943 = vmatprep.subr.mxu0 0.0
    %944 = vmatpush2.msra.mxu0 0.0
    %945 = vmatprep.mubr.f32.mxu0 0.0
    %946 = vmatmul.mubr.f32.gmra.mxu0 %v879
    %v947 = vpop.f32.mrf.mxu0
    %v948 = vadd.f32 0.0, %v947
    %v949 = vpop.f32.mrf.mxu0
    %950 = vdwg.mxu0
    %v951 = vadd.f32 %v857, %v948
    %v952 = vrot.slane %v390, 4
    %v954 = vrot.slane %v392, 3
    %v956 = vsel %vm396, %v952, %v954
    %v957 = vrot.slane %v390, 5
    %v959 = vrot.slane %v392, 4
    %v961 = vsel %vm396, %v957, %v959
    %v962 = vmax.f32 %v956, %v961
    %s963 = scalar_lea.vmem %s3, 384
    %v964 = vld [vmem:[%s963] sm:$0xff]
    %v965 = vld [vmem:[%s963 + $0x8] sm:$0xff]
    %v966 = vld [vmem:[%s963 + $0x10] sm:$0xff]
    %v967 = vld [vmem:[%s963 + $0x18] sm:$0xff]
    %v968 = vld [vmem:[%s963 + $0x20] sm:$0xff]
    %v969 = vld [vmem:[%s963 + $0x28] sm:$0xff]
    %v970 = vld [vmem:[%s963 + $0x30] sm:$0xff]
    %v971 = vld [vmem:[%s963 + $0x38] sm:$0xff]
    %v973 = vsel %vm431, %v962, 0
    %975 = vmatprep.subr.mxu0 0.0
    %976 = vmatpush1.msra.mxu0 0.0
    %977 = vmatprep.subr.mxu0 0.0
    %978 = vmatpush1.msra.mxu0 0.0
    %979 = vmatprep.subr.mxu0 0.0
    %980 = vmatpush1.msra.mxu0 0.0
    %981 = vmatprep.subr.mxu0 0.0
    %982 = vmatpush1.msra.mxu0 0.0
    %983 = vmatprep.subr.mxu0 0.0
    %984 = vmatpush1.msra.mxu0 0.0
    %985 = vmatprep.subr.mxu0 0.0
    %986 = vmatpush1.msra.mxu0 0.0
    %987 = vmatprep.subr.mxu0 0.0
    %988 = vmatpush1.msra.mxu0 0.0
    %989 = vmatprep.subr.mxu0 0.0
    %990 = vmatpush1.msra.mxu0 0.0
    %991 = vmatprep.subr.mxu0 0.0
    %992 = vmatpush1.msra.mxu0 %v971
    %993 = vmatprep.subr.mxu0 0.0
    %994 = vmatpush1.msra.mxu0 %v970
    %995 = vmatprep.subr.mxu0 0.0
    %996 = vmatpush1.msra.mxu0 %v969
    %997 = vmatprep.subr.mxu0 0.0
    %998 = vmatpush1.msra.mxu0 %v968
    %999 = vmatprep.subr.mxu0 0.0
    %1000 = vmatpush1.msra.mxu0 %v967
    %1001 = vmatprep.subr.mxu0 0.0
    %1002 = vmatpush1.msra.mxu0 %v966
    %1003 = vmatprep.subr.mxu0 0.0
    %1004 = vmatpush1.msra.mxu0 %v965
    %1005 = vmatprep.subr.mxu0 0.0
    %1006 = vmatpush1.msra.mxu0 %v964
    %1007 = vmatprep.subr.mxu0 0.0
    %1008 = vmatpush2.msra.mxu0 0.0
    %1009 = vmatprep.subr.mxu0 0.0
    %1010 = vmatpush2.msra.mxu0 0.0
    %1011 = vmatprep.subr.mxu0 0.0
    %1012 = vmatpush2.msra.mxu0 0.0
    %1013 = vmatprep.subr.mxu0 0.0
    %1014 = vmatpush2.msra.mxu0 0.0
    %1015 = vmatprep.subr.mxu0 0.0
    %1016 = vmatpush2.msra.mxu0 0.0
    %1017 = vmatprep.subr.mxu0 0.0
    %1018 = vmatpush2.msra.mxu0 0.0
    %1019 = vmatprep.subr.mxu0 0.0
    %1020 = vmatpush2.msra.mxu0 0.0
    %1021 = vmatprep.subr.mxu0 0.0
    %1022 = vmatpush2.msra.mxu0 0.0
    %1023 = vmatprep.subr.mxu0 0.0
    %1024 = vmatpush2.msra.mxu0 0.0
    %1025 = vmatprep.subr.mxu0 0.0
    %1026 = vmatpush2.msra.mxu0 0.0
    %1027 = vmatprep.subr.mxu0 0.0
    %1028 = vmatpush2.msra.mxu0 0.0
    %1029 = vmatprep.subr.mxu0 0.0
    %1030 = vmatpush2.msra.mxu0 0.0
    %1031 = vmatprep.subr.mxu0 0.0
    %1032 = vmatpush2.msra.mxu0 0.0
    %1033 = vmatprep.subr.mxu0 0.0
    %1034 = vmatpush2.msra.mxu0 0.0
    %1035 = vmatprep.subr.mxu0 0.0
    %1036 = vmatpush2.msra.mxu0 0.0
    %1037 = vmatprep.subr.mxu0 0.0
    %1038 = vmatpush2.msra.mxu0 0.0
    %1039 = vmatprep.mubr.f32.mxu0 0.0
    %1040 = vmatmul.mubr.f32.gmra.mxu0 %v973
    %v1041 = vpop.f32.mrf.mxu0
    %v1042 = vadd.f32 0.0, %v1041
    %v1043 = vpop.f32.mrf.mxu0
    %1044 = vdwg.mxu0
    %v1045 = vadd.f32 %v951, %v1042
    %v1046 = vrot.slane %v390, 6
    %v1048 = vrot.slane %v392, 5
    %v1050 = vsel %vm396, %v1046, %v1048
    %v1051 = vrot.slane %v390, 7
    %v1053 = vrot.slane %v392, 6
    %v1055 = vsel %vm396, %v1051, %v1053
    %v1056 = vmax.f32 %v1050, %v1055
    %s1057 = scalar_lea.vmem %s3, 448
    %v1058 = vld [vmem:[%s1057] sm:$0xff]
    %v1059 = vld [vmem:[%s1057 + $0x8] sm:$0xff]
    %v1060 = vld [vmem:[%s1057 + $0x10] sm:$0xff]
    %v1061 = vld [vmem:[%s1057 + $0x18] sm:$0xff]
    %v1062 = vld [vmem:[%s1057 + $0x20] sm:$0xff]
    %v1063 = vld [vmem:[%s1057 + $0x28] sm:$0xff]
    %v1064 = vld [vmem:[%s1057 + $0x30] sm:$0xff]
    %v1065 = vld [vmem:[%s1057 + $0x38] sm:$0xff]
    %v1067 = vsel %vm431, %v1056, 0
    %1069 = vmatprep.subr.mxu0 0.0
    %1070 = vmatpush1.msra.mxu0 0.0
    %1071 = vmatprep.subr.mxu0 0.0
    %1072 = vmatpush1.msra.mxu0 0.0
    %1073 = vmatprep.subr.mxu0 0.0
    %1074 = vmatpush1.msra.mxu0 0.0
    %1075 = vmatprep.subr.mxu0 0.0
    %1076 = vmatpush1.msra.mxu0 0.0
    %1077 = vmatprep.subr.mxu0 0.0
    %1078 = vmatpush1.msra.mxu0 0.0
    %1079 = vmatprep.subr.mxu0 0.0
    %1080 = vmatpush1.msra.mxu0 0.0
    %1081 = vmatprep.subr.mxu0 0.0
    %1082 = vmatpush1.msra.mxu0 0.0
    %1083 = vmatprep.subr.mxu0 0.0
    %1084 = vmatpush1.msra.mxu0 0.0
    %1085 = vmatprep.subr.mxu0 0.0
    %1086 = vmatpush1.msra.mxu0 %v1065
    %1087 = vmatprep.subr.mxu0 0.0
    %1088 = vmatpush1.msra.mxu0 %v1064
    %1089 = vmatprep.subr.mxu0 0.0
    %1090 = vmatpush1.msra.mxu0 %v1063
    %1091 = vmatprep.subr.mxu0 0.0
    %1092 = vmatpush1.msra.mxu0 %v1062
    %1093 = vmatprep.subr.mxu0 0.0
    %1094 = vmatpush1.msra.mxu0 %v1061
    %1095 = vmatprep.subr.mxu0 0.0
    %1096 = vmatpush1.msra.mxu0 %v1060
    %1097 = vmatprep.subr.mxu0 0.0
    %1098 = vmatpush1.msra.mxu0 %v1059
    %1099 = vmatprep.subr.mxu0 0.0
    %1100 = vmatpush1.msra.mxu0 %v1058
    %1101 = vmatprep.subr.mxu0 0.0
    %1102 = vmatpush2.msra.mxu0 0.0
    %1103 = vmatprep.subr.mxu0 0.0
    %1104 = vmatpush2.msra.mxu0 0.0
    %1105 = vmatprep.subr.mxu0 0.0
    %1106 = vmatpush2.msra.mxu0 0.0
    %1107 = vmatprep.subr.mxu0 0.0
    %1108 = vmatpush2.msra.mxu0 0.0
    %1109 = vmatprep.subr.mxu0 0.0
    %1110 = vmatpush2.msra.mxu0 0.0
    %1111 = vmatprep.subr.mxu0 0.0
    %1112 = vmatpush2.msra.mxu0 0.0
    %1113 = vmatprep.subr.mxu0 0.0
    %1114 = vmatpush2.msra.mxu0 0.0
    %1115 = vmatprep.subr.mxu0 0.0
    %1116 = vmatpush2.msra.mxu0 0.0
    %1117 = vmatprep.subr.mxu0 0.0
    %1118 = vmatpush2.msra.mxu0 0.0
    %1119 = vmatprep.subr.mxu0 0.0
    %1120 = vmatpush2.msra.mxu0 0.0
    %1121 = vmatprep.subr.mxu0 0.0
    %1122 = vmatpush2.msra.mxu0 0.0
    %1123 = vmatprep.subr.mxu0 0.0
    %1124 = vmatpush2.msra.mxu0 0.0
    %1125 = vmatprep.subr.mxu0 0.0
    %1126 = vmatpush2.msra.mxu0 0.0
    %1127 = vmatprep.subr.mxu0 0.0
    %1128 = vmatpush2.msra.mxu0 0.0
    %1129 = vmatprep.subr.mxu0 0.0
    %1130 = vmatpush2.msra.mxu0 0.0
    %1131 = vmatprep.subr.mxu0 0.0
    %1132 = vmatpush2.msra.mxu0 0.0
    %1133 = vmatprep.mubr.f32.mxu0 0.0
    %1134 = vmatmul.mubr.f32.gmra.mxu0 %v1067
    %v1135 = vpop.f32.mrf.mxu0
    %v1136 = vadd.f32 0.0, %v1135
    %v1137 = vpop.f32.mrf.mxu0
    %1138 = vdwg.mxu0
    %v1139 = vadd.f32 %v1045, %v1136
    %v1140 = vld [vmem:[%s4] sm:$0x1]
    %v1142 = vlaneseq
    %v1143 = vshrl.u32 %v1142, 7
    %v1144 = vsub.s32 0, %v1143
    %v1145 = vrot.slane %v1140, %v1144
    %v1147 = vadd.f32 %v1139, %v1145
    %vm1148 = vcmask 9216
    %1149 = vst.msk [vmem:[#allocation2] sm:$0x3] %vm1148, %v1147
    // Predicated region
    $region22: #{generic_network_forward.1} parent=1 // pred_check
      _
    $region23: #{generic_network_forward.1} parent=1 // pred_check_branch
      %1151 = sbr.rel (0) target = $region25
    $region24: #{generic_network_forward.1} parent=1 // pred_region
      %s1153 = ssub.s32 32, 32
      %1154 = vsyncadd [#allocation3], %s1153
      %s1156 = sshll.u32 [#allocation2], 4
      %s1157 = int_to_ptr.vmem [resolvable:$true] %s1156
      %1159 = dma.vmem_to_hbm [thread:$0]  %s1157, 32, %s5, [#allocation3]
    $region25: #{generic_network_forward.1} parent=1 // pred_fallthru
      _
    // Predicated region
    $region26: #{generic_network_forward.1} parent=1 // pred_check
      _
    $region27: #{generic_network_forward.1} parent=1 // pred_check_branch
      %1161 = sbr.rel (0) target = $region29
    $region28: #{generic_network_forward.1} parent=1 // pred_region
      %1162 = dma.done [#allocation3], 32
    $region29: #{generic_network_forward.1} parent=1 // pred_fallthru
      _
    %1163 = vsyncpa [#allocation3], 1

</llo_original>
